<compile_context>
chip_gen: v6e
topology: v6e:2x2x1
jax: 0.10.0
libtpu: 0.0.40
codegen_flags: <defaults>
</compile_context>

<pallas_src>
import functools

import numpy as np
import jax
import jax.numpy as jnp
from jax.experimental import pallas as pl
from jax.experimental.pallas import tpu as pltpu


def _roll_lanes(v, t):
    """Circular shift of a (rows, HW) value along the lane (last) axis by a
    static amount t, i.e. result[:, p] = v[:, (p - t) mod HW]."""
    hw = v.shape[-1]
    t = t % hw
    if t == 0:
        return v
    return jnp.concatenate([v[:, hw - t:], v[:, :hw - t]], axis=1)


def _spatial_attention_kernel(x_ref, w_ref, o_ref, *, shifts):
    """x_ref: (1, C, HW) input block.
    w_ref: (2*K*K, HW) per-tap conv weight folded with its zero-pad validity
           mask; row 2k -> tap k on the channel-avg map, row 2k+1 -> tap k on
           the channel-max map.
    o_ref: (1, C, HW) output block."""
    x = x_ref[0].astype(jnp.float32)                    # (C, HW)
    hw = x.shape[1]

    # Channel pooling: sublane reductions -> lane-dense (1, HW) rows.
    avg_s = jnp.mean(x, axis=0, keepdims=True)          # (1, HW)
    max_s = jnp.max(x, axis=0, keepdims=True)           # (1, HW)
    m2 = jnp.concatenate([avg_s, max_s], axis=0)        # (2, HW)

    # 7x7 conv (zero pad, stride 1) as K*K shifted, mask-weighted adds.
    acc = jnp.zeros((2, hw), dtype=jnp.float32)
    for k, t in enumerate(shifts):
        shifted = _roll_lanes(m2, t)                    # (2, HW)
        acc = acc + shifted * w_ref[pl.ds(2 * k, 2), :]
    logit = jnp.sum(acc, axis=0, keepdims=True)         # (1, HW): avg + max paths

    sa = jax.nn.sigmoid(logit)                          # (1, HW)
    o_ref[0] = (x * sa).astype(o_ref.dtype)             # broadcast over C sublanes


def spatial_attention_pallas(x_nchw, conv_w):
    """SpatialAttention forward.
    x_nchw : (N, C, H, W) input.
    conv_w : (1, 2, K, K) Conv2d(2, 1, K, padding=K//2, bias=False) weight (OIHW)."""
    N, C, H, W = x_nchw.shape
    K = conv_w.shape[-1]
    KK = K * K
    pad = K // 2
    HW = H * W

    # NCHW -> (N, C, HW): pure reshape, no transpose (lane axis = HW).
    x = x_nchw.reshape(N, C, HW)

    # Static per-tap shift amounts and zero-pad validity masks for the KxK
    # conv on the flattened spatial axis:
    #   out[p] = sum_k w_k * m[p + s_k] * valid_k(p)
    rows = np.arange(H)[:, None]
    cols = np.arange(W)[None, :]
    shifts, masks = [], []
    for di in range(K):
        for dj in range(K):
            oi, oj = di - pad, dj - pad
            valid = ((rows + oi >= 0) & (rows + oi < H) &
                     (cols + oj >= 0) & (cols + oj < W))       # (H, W)
            masks.append(valid.reshape(HW).astype(np.float32))
            shifts.append(int((-(oi * W + oj)) % HW))
    mask_np = np.stack(masks)                                  # (KK, HW)

    # Fold the (traced) conv weights into the static masks: row 2k = tap k
    # for the avg map, row 2k+1 = tap k for the max map.
    w_taps = jnp.asarray(conv_w, jnp.float32).reshape(2, KK).T           # (KK, 2)
    w_all = (w_taps[:, :, None] * jnp.asarray(mask_np)[:, None, :])      # (KK, 2, HW)
    w_all = w_all.reshape(2 * KK, HW)

    kernel = functools.partial(_spatial_attention_kernel, shifts=tuple(shifts))

    out = pl.pallas_call(
        kernel,
        out_shape=jax.ShapeDtypeStruct((N, C, HW), x.dtype),
        grid_spec=pltpu.PrefetchScalarGridSpec(
            num_scalar_prefetch=0,
            grid=(N,),
            in_specs=[
                pl.BlockSpec((1, C, HW), lambda n: (n, 0, 0)),
                pl.BlockSpec((2 * KK, HW), lambda n: (0, 0)),   # fetched once
            ],
            out_specs=pl.BlockSpec((1, C, HW), lambda n: (n, 0, 0)),
        ),
        compiler_params=pltpu.CompilerParams(
            dimension_semantics=("parallel",)),   # batch sharded across TCs on v7x
    )(x, w_all)

    return out.reshape(N, C, H, W)


def spatial_attention_reference(x, conv_w):
    """Plain-JAX reference mirroring the PyTorch module (NCHW)."""
    pad = conv_w.shape[-1] // 2
    avg = jnp.mean(x, axis=1, keepdims=True)
    mx = jnp.max(x, axis=1, keepdims=True)
    m = jnp.concatenate([avg, mx], axis=1)
    conv = jax.lax.conv_general_dilated(
        m, conv_w, window_strides=(1, 1),
        padding=[(pad, pad), (pad, pad)],
        dimension_numbers=("NCHW", "OIHW", "NCHW"),
        precision=jax.lax.Precision.HIGHEST)
    return x * jax.nn.sigmoid(conv)


if __name__ == "__main__":
    # SpatialAttention(kernel_size=7) on a (2, 4, 16, 16) input.
    N, C, H, W = 2, 4, 16, 16
    K = 7

    key = jax.random.PRNGKey(0)
    kx, kw = jax.random.split(key)
    x = jax.random.normal(kx, (N, C, H, W), dtype=jnp.float32)
    conv_w = jax.random.normal(kw, (1, 2, K, K), dtype=jnp.float32) * (
        1.0 / np.sqrt(2 * K * K))

    out = spatial_attention_pallas(x, conv_w)
    out = jax.block_until_ready(out)

    ref = spatial_attention_reference(x, conv_w)
    np.testing.assert_allclose(np.asarray(out), np.asarray(ref),
                               rtol=1e-4, atol=1e-4)
    print("KERNEL_OK")
</pallas_src>

<mosaic_0001>
module attributes {stable_mosaic.version = 11 : i64} {
  func.func @_spatial_attention_kernel(%arg0: i32, %arg1: memref<1x4x256xf32, #tpu.memory_space<vmem>>, %arg2: memref<98x256xf32, #tpu.memory_space<vmem>>, %arg3: memref<1x4x256xf32, #tpu.memory_space<vmem>>) attributes {dimension_semantics = [#tpu.dimension_semantics<parallel>], iteration_bounds = array<i64: 2>, scalar_prefetch = 0 : i64, scratch_operands = 0 : i64, tpu.core_type = #tpu.core_type<tc>, window_params = [{transform_indices = @transform_0, window_bounds = array<i64: 1, 4, 256>}, {pipeline_mode = #tpu.pipeline_mode<synchronous>, transform_indices = @transform_1, window_bounds = array<i64: 98, 256>}, {transform_indices = @transform_2, window_bounds = array<i64: 1, 4, 256>}]} {
    %c0 = arith.constant 0 : index
    %c0_0 = arith.constant 0 : index
    %c0_1 = arith.constant 0 : index
    %0 = vector.load %arg1[%c0, %c0_0, %c0_1] : memref<1x4x256xf32, #tpu.memory_space<vmem>>, vector<1x4x256xf32>
    %1 = vector.shape_cast %0 : vector<1x4x256xf32> to vector<4x256xf32>
    %cst = arith.constant dense<0.000000e+00> : vector<256xf32>
    %2 = vector.multi_reduction <add>, %1, %cst [0] : vector<4x256xf32> to vector<256xf32>
    %3 = vector.shape_cast %2 : vector<256xf32> to vector<1x256xf32>
    %cst_2 = arith.constant 4.000000e+00 : f32
    %4 = vector.broadcast %cst_2 : f32 to vector<1x256xf32>
    %5 = arith.divf %3, %4 : vector<1x256xf32>
    %cst_3 = arith.constant dense<0xFF800000> : vector<256xf32>
    %6 = vector.multi_reduction <maximumf>, %1, %cst_3 [0] : vector<4x256xf32> to vector<256xf32>
    %7 = vector.shape_cast %6 : vector<256xf32> to vector<1x256xf32>
    %8 = tpu.concatenate %5, %7 in 0 : vector<1x256xf32>, vector<1x256xf32> -> vector<2x256xf32>
    %cst_4 = arith.constant 0.000000e+00 : f32
    %9 = vector.broadcast %cst_4 : f32 to vector<2x256xf32>
    %10 = vector.extract_strided_slice %8 {offsets = [0, 205], sizes = [2, 51], strides = [1, 1]} : vector<2x256xf32> to vector<2x51xf32>
    %11 = vector.extract_strided_slice %8 {offsets = [0, 0], sizes = [2, 205], strides = [1, 1]} : vector<2x256xf32> to vector<2x205xf32>
    %12 = tpu.concatenate %10, %11 in 1 : vector<2x51xf32>, vector<2x205xf32> -> vector<2x256xf32>
    %c0_5 = arith.constant 0 : index
    %c0_6 = arith.constant 0 : index
    %13 = vector.load %arg2[%c0_5, %c0_6] : memref<98x256xf32, #tpu.memory_space<vmem>>, vector<2x256xf32>
    %14 = arith.mulf %12, %13 : vector<2x256xf32>
    %15 = arith.addf %9, %14 : vector<2x256xf32>
    %16 = vector.extract_strided_slice %8 {offsets = [0, 206], sizes = [2, 50], strides = [1, 1]} : vector<2x256xf32> to vector<2x50xf32>
    %17 = vector.extract_strided_slice %8 {offsets = [0, 0], sizes = [2, 206], strides = [1, 1]} : vector<2x256xf32> to vector<2x206xf32>
    %18 = tpu.concatenate %16, %17 in 1 : vector<2x50xf32>, vector<2x206xf32> -> vector<2x256xf32>
    %c2 = arith.constant 2 : index
    %c0_7 = arith.constant 0 : index
    %19 = vector.load %arg2[%c2, %c0_7] : memref<98x256xf32, #tpu.memory_space<vmem>>, vector<2x256xf32>
    %20 = arith.mulf %18, %19 : vector<2x256xf32>
    %21 = arith.addf %15, %20 : vector<2x256xf32>
    %22 = vector.extract_strided_slice %8 {offsets = [0, 207], sizes = [2, 49], strides = [1, 1]} : vector<2x256xf32> to vector<2x49xf32>
    %23 = vector.extract_strided_slice %8 {offsets = [0, 0], sizes = [2, 207], strides = [1, 1]} : vector<2x256xf32> to vector<2x207xf32>
    %24 = tpu.concatenate %22, %23 in 1 : vector<2x49xf32>, vector<2x207xf32> -> vector<2x256xf32>
    %c4 = arith.constant 4 : index
    %c0_8 = arith.constant 0 : index
    %25 = vector.load %arg2[%c4, %c0_8] : memref<98x256xf32, #tpu.memory_space<vmem>>, vector<2x256xf32>
    %26 = arith.mulf %24, %25 : vector<2x256xf32>
    %27 = arith.addf %21, %26 : vector<2x256xf32>
    %28 = vector.extract_strided_slice %8 {offsets = [0, 208], sizes = [2, 48], strides = [1, 1]} : vector<2x256xf32> to vector<2x48xf32>
    %29 = vector.extract_strided_slice %8 {offsets = [0, 0], sizes = [2, 208], strides = [1, 1]} : vector<2x256xf32> to vector<2x208xf32>
    %30 = tpu.concatenate %28, %29 in 1 : vector<2x48xf32>, vector<2x208xf32> -> vector<2x256xf32>
    %c6 = arith.constant 6 : index
    %c0_9 = arith.constant 0 : index
    %31 = vector.load %arg2[%c6, %c0_9] : memref<98x256xf32, #tpu.memory_space<vmem>>, vector<2x256xf32>
    %32 = arith.mulf %30, %31 : vector<2x256xf32>
    %33 = arith.addf %27, %32 : vector<2x256xf32>
    %34 = vector.extract_strided_slice %8 {offsets = [0, 209], sizes = [2, 47], strides = [1, 1]} : vector<2x256xf32> to vector<2x47xf32>
    %35 = vector.extract_strided_slice %8 {offsets = [0, 0], sizes = [2, 209], strides = [1, 1]} : vector<2x256xf32> to vector<2x209xf32>
    %36 = tpu.concatenate %34, %35 in 1 : vector<2x47xf32>, vector<2x209xf32> -> vector<2x256xf32>
    %c8 = arith.constant 8 : index
    %c0_10 = arith.constant 0 : index
    %37 = vector.load %arg2[%c8, %c0_10] : memref<98x256xf32, #tpu.memory_space<vmem>>, vector<2x256xf32>
    %38 = arith.mulf %36, %37 : vector<2x256xf32>
    %39 = arith.addf %33, %38 : vector<2x256xf32>
    %40 = vector.extract_strided_slice %8 {offsets = [0, 210], sizes = [2, 46], strides = [1, 1]} : vector<2x256xf32> to vector<2x46xf32>
    %41 = vector.extract_strided_slice %8 {offsets = [0, 0], sizes = [2, 210], strides = [1, 1]} : vector<2x256xf32> to vector<2x210xf32>
    %42 = tpu.concatenate %40, %41 in 1 : vector<2x46xf32>, vector<2x210xf32> -> vector<2x256xf32>
    %c10 = arith.constant 10 : index
    %c0_11 = arith.constant 0 : index
    %43 = vector.load %arg2[%c10, %c0_11] : memref<98x256xf32, #tpu.memory_space<vmem>>, vector<2x256xf32>
    %44 = arith.mulf %42, %43 : vector<2x256xf32>
    %45 = arith.addf %39, %44 : vector<2x256xf32>
    %46 = vector.extract_strided_slice %8 {offsets = [0, 211], sizes = [2, 45], strides = [1, 1]} : vector<2x256xf32> to vector<2x45xf32>
    %47 = vector.extract_strided_slice %8 {offsets = [0, 0], sizes = [2, 211], strides = [1, 1]} : vector<2x256xf32> to vector<2x211xf32>
    %48 = tpu.concatenate %46, %47 in 1 : vector<2x45xf32>, vector<2x211xf32> -> vector<2x256xf32>
    %c12 = arith.constant 12 : index
    %c0_12 = arith.constant 0 : index
    %49 = vector.load %arg2[%c12, %c0_12] : memref<98x256xf32, #tpu.memory_space<vmem>>, vector<2x256xf32>
    %50 = arith.mulf %48, %49 : vector<2x256xf32>
    %51 = arith.addf %45, %50 : vector<2x256xf32>
    %52 = vector.extract_strided_slice %8 {offsets = [0, 221], sizes = [2, 35], strides = [1, 1]} : vector<2x256xf32> to vector<2x35xf32>
    %53 = vector.extract_strided_slice %8 {offsets = [0, 0], sizes = [2, 221], strides = [1, 1]} : vector<2x256xf32> to vector<2x221xf32>
    %54 = tpu.concatenate %52, %53 in 1 : vector<2x35xf32>, vector<2x221xf32> -> vector<2x256xf32>
    %c14 = arith.constant 14 : index
    %c0_13 = arith.constant 0 : index
    %55 = vector.load %arg2[%c14, %c0_13] : memref<98x256xf32, #tpu.memory_space<vmem>>, vector<2x256xf32>
    %56 = arith.mulf %54, %55 : vector<2x256xf32>
    %57 = arith.addf %51, %56 : vector<2x256xf32>
    %58 = vector.extract_strided_slice %8 {offsets = [0, 222], sizes = [2, 34], strides = [1, 1]} : vector<2x256xf32> to vector<2x34xf32>
    %59 = vector.extract_strided_slice %8 {offsets = [0, 0], sizes = [2, 222], strides = [1, 1]} : vector<2x256xf32> to vector<2x222xf32>
    %60 = tpu.concatenate %58, %59 in 1 : vector<2x34xf32>, vector<2x222xf32> -> vector<2x256xf32>
    %c16 = arith.constant 16 : index
    %c0_14 = arith.constant 0 : index
    %61 = vector.load %arg2[%c16, %c0_14] : memref<98x256xf32, #tpu.memory_space<vmem>>, vector<2x256xf32>
    %62 = arith.mulf %60, %61 : vector<2x256xf32>
    %63 = arith.addf %57, %62 : vector<2x256xf32>
    %64 = vector.extract_strided_slice %8 {offsets = [0, 223], sizes = [2, 33], strides = [1, 1]} : vector<2x256xf32> to vector<2x33xf32>
    %65 = vector.extract_strided_slice %8 {offsets = [0, 0], sizes = [2, 223], strides = [1, 1]} : vector<2x256xf32> to vector<2x223xf32>
    %66 = tpu.concatenate %64, %65 in 1 : vector<2x33xf32>, vector<2x223xf32> -> vector<2x256xf32>
    %c18 = arith.constant 18 : index
    %c0_15 = arith.constant 0 : index
    %67 = vector.load %arg2[%c18, %c0_15] : memref<98x256xf32, #tpu.memory_space<vmem>>, vector<2x256xf32>
    %68 = arith.mulf %66, %67 : vector<2x256xf32>
    %69 = arith.addf %63, %68 : vector<2x256xf32>
    %70 = vector.extract_strided_slice %8 {offsets = [0, 224], sizes = [2, 32], strides = [1, 1]} : vector<2x256xf32> to vector<2x32xf32>
    %71 = vector.extract_strided_slice %8 {offsets = [0, 0], sizes = [2, 224], strides = [1, 1]} : vector<2x256xf32> to vector<2x224xf32>
    %72 = tpu.concatenate %70, %71 in 1 : vector<2x32xf32>, vector<2x224xf32> -> vector<2x256xf32>
    %c20 = arith.constant 20 : index
    %c0_16 = arith.constant 0 : index
    %73 = vector.load %arg2[%c20, %c0_16] : memref<98x256xf32, #tpu.memory_space<vmem>>, vector<2x256xf32>
    %74 = arith.mulf %72, %73 : vector<2x256xf32>
    %75 = arith.addf %69, %74 : vector<2x256xf32>
    %76 = vector.extract_strided_slice %8 {offsets = [0, 225], sizes = [2, 31], strides = [1, 1]} : vector<2x256xf32> to vector<2x31xf32>
    %77 = vector.extract_strided_slice %8 {offsets = [0, 0], sizes = [2, 225], strides = [1, 1]} : vector<2x256xf32> to vector<2x225xf32>
    %78 = tpu.concatenate %76, %77 in 1 : vector<2x31xf32>, vector<2x225xf32> -> vector<2x256xf32>
    %c22 = arith.constant 22 : index
    %c0_17 = arith.constant 0 : index
    %79 = vector.load %arg2[%c22, %c0_17] : memref<98x256xf32, #tpu.memory_space<vmem>>, vector<2x256xf32>
    %80 = arith.mulf %78, %79 : vector<2x256xf32>
    %81 = arith.addf %75, %80 : vector<2x256xf32>
    %82 = vector.extract_strided_slice %8 {offsets = [0, 226], sizes = [2, 30], strides = [1, 1]} : vector<2x256xf32> to vector<2x30xf32>
    %83 = vector.extract_strided_slice %8 {offsets = [0, 0], sizes = [2, 226], strides = [1, 1]} : vector<2x256xf32> to vector<2x226xf32>
    %84 = tpu.concatenate %82, %83 in 1 : vector<2x30xf32>, vector<2x226xf32> -> vector<2x256xf32>
    %c24 = arith.constant 24 : index
    %c0_18 = arith.constant 0 : index
    %85 = vector.load %arg2[%c24, %c0_18] : memref<98x256xf32, #tpu.memory_space<vmem>>, vector<2x256xf32>
    %86 = arith.mulf %84, %85 : vector<2x256xf32>
    %87 = arith.addf %81, %86 : vector<2x256xf32>
    %88 = vector.extract_strided_slice %8 {offsets = [0, 227], sizes = [2, 29], strides = [1, 1]} : vector<2x256xf32> to vector<2x29xf32>
    %89 = vector.extract_strided_slice %8 {offsets = [0, 0], sizes = [2, 227], strides = [1, 1]} : vector<2x256xf32> to vector<2x227xf32>
    %90 = tpu.concatenate %88, %89 in 1 : vector<2x29xf32>, vector<2x227xf32> -> vector<2x256xf32>
    %c26 = arith.constant 26 : index
    %c0_19 = arith.constant 0 : index
    %91 = vector.load %arg2[%c26, %c0_19] : memref<98x256xf32, #tpu.memory_space<vmem>>, vector<2x256xf32>
    %92 = arith.mulf %90, %91 : vector<2x256xf32>
    %93 = arith.addf %87, %92 : vector<2x256xf32>
    %94 = vector.extract_strided_slice %8 {offsets = [0, 237], sizes = [2, 19], strides = [1, 1]} : vector<2x256xf32> to vector<2x19xf32>
    %95 = vector.extract_strided_slice %8 {offsets = [0, 0], sizes = [2, 237], strides = [1, 1]} : vector<2x256xf32> to vector<2x237xf32>
    %96 = tpu.concatenate %94, %95 in 1 : vector<2x19xf32>, vector<2x237xf32> -> vector<2x256xf32>
    %c28 = arith.constant 28 : index
    %c0_20 = arith.constant 0 : index
    %97 = vector.load %arg2[%c28, %c0_20] : memref<98x256xf32, #tpu.memory_space<vmem>>, vector<2x256xf32>
    %98 = arith.mulf %96, %97 : vector<2x256xf32>
    %99 = arith.addf %93, %98 : vector<2x256xf32>
    %100 = vector.extract_strided_slice %8 {offsets = [0, 238], sizes = [2, 18], strides = [1, 1]} : vector<2x256xf32> to vector<2x18xf32>
    %101 = vector.extract_strided_slice %8 {offsets = [0, 0], sizes = [2, 238], strides = [1, 1]} : vector<2x256xf32> to vector<2x238xf32>
    %102 = tpu.concatenate %100, %101 in 1 : vector<2x18xf32>, vector<2x238xf32> -> vector<2x256xf32>
    %c30 = arith.constant 30 : index
    %c0_21 = arith.constant 0 : index
    %103 = vector.load %arg2[%c30, %c0_21] : memref<98x256xf32, #tpu.memory_space<vmem>>, vector<2x256xf32>
    %104 = arith.mulf %102, %103 : vector<2x256xf32>
    %105 = arith.addf %99, %104 : vector<2x256xf32>
    %106 = vector.extract_strided_slice %8 {offsets = [0, 239], sizes = [2, 17], strides = [1, 1]} : vector<2x256xf32> to vector<2x17xf32>
    %107 = vector.extract_strided_slice %8 {offsets = [0, 0], sizes = [2, 239], strides = [1, 1]} : vector<2x256xf32> to vector<2x239xf32>
    %108 = tpu.concatenate %106, %107 in 1 : vector<2x17xf32>, vector<2x239xf32> -> vector<2x256xf32>
    %c32 = arith.constant 32 : index
    %c0_22 = arith.constant 0 : index
    %109 = vector.load %arg2[%c32, %c0_22] : memref<98x256xf32, #tpu.memory_space<vmem>>, vector<2x256xf32>
    %110 = arith.mulf %108, %109 : vector<2x256xf32>
    %111 = arith.addf %105, %110 : vector<2x256xf32>
    %112 = vector.extract_strided_slice %8 {offsets = [0, 240], sizes = [2, 16], strides = [1, 1]} : vector<2x256xf32> to vector<2x16xf32>
    %113 = vector.extract_strided_slice %8 {offsets = [0, 0], sizes = [2, 240], strides = [1, 1]} : vector<2x256xf32> to vector<2x240xf32>
    %114 = tpu.concatenate %112, %113 in 1 : vector<2x16xf32>, vector<2x240xf32> -> vector<2x256xf32>
    %c34 = arith.constant 34 : index
    %c0_23 = arith.constant 0 : index
    %115 = vector.load %arg2[%c34, %c0_23] : memref<98x256xf32, #tpu.memory_space<vmem>>, vector<2x256xf32>
    %116 = arith.mulf %114, %115 : vector<2x256xf32>
    %117 = arith.addf %111, %116 : vector<2x256xf32>
    %118 = vector.extract_strided_slice %8 {offsets = [0, 241], sizes = [2, 15], strides = [1, 1]} : vector<2x256xf32> to vector<2x15xf32>
    %119 = vector.extract_strided_slice %8 {offsets = [0, 0], sizes = [2, 241], strides = [1, 1]} : vector<2x256xf32> to vector<2x241xf32>
    %120 = tpu.concatenate %118, %119 in 1 : vector<2x15xf32>, vector<2x241xf32> -> vector<2x256xf32>
    %c36 = arith.constant 36 : index
    %c0_24 = arith.constant 0 : index
    %121 = vector.load %arg2[%c36, %c0_24] : memref<98x256xf32, #tpu.memory_space<vmem>>, vector<2x256xf32>
    %122 = arith.mulf %120, %121 : vector<2x256xf32>
    %123 = arith.addf %117, %122 : vector<2x256xf32>
    %124 = vector.extract_strided_slice %8 {offsets = [0, 242], sizes = [2, 14], strides = [1, 1]} : vector<2x256xf32> to vector<2x14xf32>
    %125 = vector.extract_strided_slice %8 {offsets = [0, 0], sizes = [2, 242], strides = [1, 1]} : vector<2x256xf32> to vector<2x242xf32>
    %126 = tpu.concatenate %124, %125 in 1 : vector<2x14xf32>, vector<2x242xf32> -> vector<2x256xf32>
    %c38 = arith.constant 38 : index
    %c0_25 = arith.constant 0 : index
    %127 = vector.load %arg2[%c38, %c0_25] : memref<98x256xf32, #tpu.memory_space<vmem>>, vector<2x256xf32>
    %128 = arith.mulf %126, %127 : vector<2x256xf32>
    %129 = arith.addf %123, %128 : vector<2x256xf32>
    %130 = vector.extract_strided_slice %8 {offsets = [0, 243], sizes = [2, 13], strides = [1, 1]} : vector<2x256xf32> to vector<2x13xf32>
    %131 = vector.extract_strided_slice %8 {offsets = [0, 0], sizes = [2, 243], strides = [1, 1]} : vector<2x256xf32> to vector<2x243xf32>
    %132 = tpu.concatenate %130, %131 in 1 : vector<2x13xf32>, vector<2x243xf32> -> vector<2x256xf32>
    %c40 = arith.constant 40 : index
    %c0_26 = arith.constant 0 : index
    %133 = vector.load %arg2[%c40, %c0_26] : memref<98x256xf32, #tpu.memory_space<vmem>>, vector<2x256xf32>
    %134 = arith.mulf %132, %133 : vector<2x256xf32>
    %135 = arith.addf %129, %134 : vector<2x256xf32>
    %136 = vector.extract_strided_slice %8 {offsets = [0, 253], sizes = [2, 3], strides = [1, 1]} : vector<2x256xf32> to vector<2x3xf32>
    %137 = vector.extract_strided_slice %8 {offsets = [0, 0], sizes = [2, 253], strides = [1, 1]} : vector<2x256xf32> to vector<2x253xf32>
    %138 = tpu.concatenate %136, %137 in 1 : vector<2x3xf32>, vector<2x253xf32> -> vector<2x256xf32>
    %c42 = arith.constant 42 : index
    %c0_27 = arith.constant 0 : index
    %139 = vector.load %arg2[%c42, %c0_27] : memref<98x256xf32, #tpu.memory_space<vmem>>, vector<2x256xf32>
    %140 = arith.mulf %138, %139 : vector<2x256xf32>
    %141 = arith.addf %135, %140 : vector<2x256xf32>
    %142 = vector.extract_strided_slice %8 {offsets = [0, 254], sizes = [2, 2], strides = [1, 1]} : vector<2x256xf32> to vector<2x2xf32>
    %143 = vector.extract_strided_slice %8 {offsets = [0, 0], sizes = [2, 254], strides = [1, 1]} : vector<2x256xf32> to vector<2x254xf32>
    %144 = tpu.concatenate %142, %143 in 1 : vector<2x2xf32>, vector<2x254xf32> -> vector<2x256xf32>
    %c44 = arith.constant 44 : index
    %c0_28 = arith.constant 0 : index
    %145 = vector.load %arg2[%c44, %c0_28] : memref<98x256xf32, #tpu.memory_space<vmem>>, vector<2x256xf32>
    %146 = arith.mulf %144, %145 : vector<2x256xf32>
    %147 = arith.addf %141, %146 : vector<2x256xf32>
    %148 = vector.extract_strided_slice %8 {offsets = [0, 255], sizes = [2, 1], strides = [1, 1]} : vector<2x256xf32> to vector<2x1xf32>
    %149 = vector.extract_strided_slice %8 {offsets = [0, 0], sizes = [2, 255], strides = [1, 1]} : vector<2x256xf32> to vector<2x255xf32>
    %150 = tpu.concatenate %148, %149 in 1 : vector<2x1xf32>, vector<2x255xf32> -> vector<2x256xf32>
    %c46 = arith.constant 46 : index
    %c0_29 = arith.constant 0 : index
    %151 = vector.load %arg2[%c46, %c0_29] : memref<98x256xf32, #tpu.memory_space<vmem>>, vector<2x256xf32>
    %152 = arith.mulf %150, %151 : vector<2x256xf32>
    %153 = arith.addf %147, %152 : vector<2x256xf32>
    %c48 = arith.constant 48 : index
    %c0_30 = arith.constant 0 : index
    %154 = vector.load %arg2[%c48, %c0_30] : memref<98x256xf32, #tpu.memory_space<vmem>>, vector<2x256xf32>
    %155 = arith.mulf %8, %154 : vector<2x256xf32>
    %156 = arith.addf %153, %155 : vector<2x256xf32>
    %157 = vector.extract_strided_slice %8 {offsets = [0, 1], sizes = [2, 255], strides = [1, 1]} : vector<2x256xf32> to vector<2x255xf32>
    %158 = vector.extract_strided_slice %8 {offsets = [0, 0], sizes = [2, 1], strides = [1, 1]} : vector<2x256xf32> to vector<2x1xf32>
    %159 = tpu.concatenate %157, %158 in 1 : vector<2x255xf32>, vector<2x1xf32> -> vector<2x256xf32>
    %c50 = arith.constant 50 : index
    %c0_31 = arith.constant 0 : index
    %160 = vector.load %arg2[%c50, %c0_31] : memref<98x256xf32, #tpu.memory_space<vmem>>, vector<2x256xf32>
    %161 = arith.mulf %159, %160 : vector<2x256xf32>
    %162 = arith.addf %156, %161 : vector<2x256xf32>
    %163 = vector.extract_strided_slice %8 {offsets = [0, 2], sizes = [2, 254], strides = [1, 1]} : vector<2x256xf32> to vector<2x254xf32>
    %164 = vector.extract_strided_slice %8 {offsets = [0, 0], sizes = [2, 2], strides = [1, 1]} : vector<2x256xf32> to vector<2x2xf32>
    %165 = tpu.concatenate %163, %164 in 1 : vector<2x254xf32>, vector<2x2xf32> -> vector<2x256xf32>
    %c52 = arith.constant 52 : index
    %c0_32 = arith.constant 0 : index
    %166 = vector.load %arg2[%c52, %c0_32] : memref<98x256xf32, #tpu.memory_space<vmem>>, vector<2x256xf32>
    %167 = arith.mulf %165, %166 : vector<2x256xf32>
    %168 = arith.addf %162, %167 : vector<2x256xf32>
    %169 = vector.extract_strided_slice %8 {offsets = [0, 3], sizes = [2, 253], strides = [1, 1]} : vector<2x256xf32> to vector<2x253xf32>
    %170 = vector.extract_strided_slice %8 {offsets = [0, 0], sizes = [2, 3], strides = [1, 1]} : vector<2x256xf32> to vector<2x3xf32>
    %171 = tpu.concatenate %169, %170 in 1 : vector<2x253xf32>, vector<2x3xf32> -> vector<2x256xf32>
    %c54 = arith.constant 54 : index
    %c0_33 = arith.constant 0 : index
    %172 = vector.load %arg2[%c54, %c0_33] : memref<98x256xf32, #tpu.memory_space<vmem>>, vector<2x256xf32>
    %173 = arith.mulf %171, %172 : vector<2x256xf32>
    %174 = arith.addf %168, %173 : vector<2x256xf32>
    %175 = vector.extract_strided_slice %8 {offsets = [0, 13], sizes = [2, 243], strides = [1, 1]} : vector<2x256xf32> to vector<2x243xf32>
    %176 = vector.extract_strided_slice %8 {offsets = [0, 0], sizes = [2, 13], strides = [1, 1]} : vector<2x256xf32> to vector<2x13xf32>
    %177 = tpu.concatenate %175, %176 in 1 : vector<2x243xf32>, vector<2x13xf32> -> vector<2x256xf32>
    %c56 = arith.constant 56 : index
    %c0_34 = arith.constant 0 : index
    %178 = vector.load %arg2[%c56, %c0_34] : memref<98x256xf32, #tpu.memory_space<vmem>>, vector<2x256xf32>
    %179 = arith.mulf %177, %178 : vector<2x256xf32>
    %180 = arith.addf %174, %179 : vector<2x256xf32>
    %181 = vector.extract_strided_slice %8 {offsets = [0, 14], sizes = [2, 242], strides = [1, 1]} : vector<2x256xf32> to vector<2x242xf32>
    %182 = vector.extract_strided_slice %8 {offsets = [0, 0], sizes = [2, 14], strides = [1, 1]} : vector<2x256xf32> to vector<2x14xf32>
    %183 = tpu.concatenate %181, %182 in 1 : vector<2x242xf32>, vector<2x14xf32> -> vector<2x256xf32>
    %c58 = arith.constant 58 : index
    %c0_35 = arith.constant 0 : index
    %184 = vector.load %arg2[%c58, %c0_35] : memref<98x256xf32, #tpu.memory_space<vmem>>, vector<2x256xf32>
    %185 = arith.mulf %183, %184 : vector<2x256xf32>
    %186 = arith.addf %180, %185 : vector<2x256xf32>
    %187 = vector.extract_strided_slice %8 {offsets = [0, 15], sizes = [2, 241], strides = [1, 1]} : vector<2x256xf32> to vector<2x241xf32>
    %188 = vector.extract_strided_slice %8 {offsets = [0, 0], sizes = [2, 15], strides = [1, 1]} : vector<2x256xf32> to vector<2x15xf32>
    %189 = tpu.concatenate %187, %188 in 1 : vector<2x241xf32>, vector<2x15xf32> -> vector<2x256xf32>
    %c60 = arith.constant 60 : index
    %c0_36 = arith.constant 0 : index
    %190 = vector.load %arg2[%c60, %c0_36] : memref<98x256xf32, #tpu.memory_space<vmem>>, vector<2x256xf32>
    %191 = arith.mulf %189, %190 : vector<2x256xf32>
    %192 = arith.addf %186, %191 : vector<2x256xf32>
    %193 = vector.extract_strided_slice %8 {offsets = [0, 16], sizes = [2, 240], strides = [1, 1]} : vector<2x256xf32> to vector<2x240xf32>
    %194 = vector.extract_strided_slice %8 {offsets = [0, 0], sizes = [2, 16], strides = [1, 1]} : vector<2x256xf32> to vector<2x16xf32>
    %195 = tpu.concatenate %193, %194 in 1 : vector<2x240xf32>, vector<2x16xf32> -> vector<2x256xf32>
    %c62 = arith.constant 62 : index
    %c0_37 = arith.constant 0 : index
    %196 = vector.load %arg2[%c62, %c0_37] : memref<98x256xf32, #tpu.memory_space<vmem>>, vector<2x256xf32>
    %197 = arith.mulf %195, %196 : vector<2x256xf32>
    %198 = arith.addf %192, %197 : vector<2x256xf32>
    %199 = vector.extract_strided_slice %8 {offsets = [0, 17], sizes = [2, 239], strides = [1, 1]} : vector<2x256xf32> to vector<2x239xf32>
    %200 = vector.extract_strided_slice %8 {offsets = [0, 0], sizes = [2, 17], strides = [1, 1]} : vector<2x256xf32> to vector<2x17xf32>
    %201 = tpu.concatenate %199, %200 in 1 : vector<2x239xf32>, vector<2x17xf32> -> vector<2x256xf32>
    %c64 = arith.constant 64 : index
    %c0_38 = arith.constant 0 : index
    %202 = vector.load %arg2[%c64, %c0_38] : memref<98x256xf32, #tpu.memory_space<vmem>>, vector<2x256xf32>
    %203 = arith.mulf %201, %202 : vector<2x256xf32>
    %204 = arith.addf %198, %203 : vector<2x256xf32>
    %205 = vector.extract_strided_slice %8 {offsets = [0, 18], sizes = [2, 238], strides = [1, 1]} : vector<2x256xf32> to vector<2x238xf32>
    %206 = vector.extract_strided_slice %8 {offsets = [0, 0], sizes = [2, 18], strides = [1, 1]} : vector<2x256xf32> to vector<2x18xf32>
    %207 = tpu.concatenate %205, %206 in 1 : vector<2x238xf32>, vector<2x18xf32> -> vector<2x256xf32>
    %c66 = arith.constant 66 : index
    %c0_39 = arith.constant 0 : index
    %208 = vector.load %arg2[%c66, %c0_39] : memref<98x256xf32, #tpu.memory_space<vmem>>, vector<2x256xf32>
    %209 = arith.mulf %207, %208 : vector<2x256xf32>
    %210 = arith.addf %204, %209 : vector<2x256xf32>
    %211 = vector.extract_strided_slice %8 {offsets = [0, 19], sizes = [2, 237], strides = [1, 1]} : vector<2x256xf32> to vector<2x237xf32>
    %212 = vector.extract_strided_slice %8 {offsets = [0, 0], sizes = [2, 19], strides = [1, 1]} : vector<2x256xf32> to vector<2x19xf32>
    %213 = tpu.concatenate %211, %212 in 1 : vector<2x237xf32>, vector<2x19xf32> -> vector<2x256xf32>
    %c68 = arith.constant 68 : index
    %c0_40 = arith.constant 0 : index
    %214 = vector.load %arg2[%c68, %c0_40] : memref<98x256xf32, #tpu.memory_space<vmem>>, vector<2x256xf32>
    %215 = arith.mulf %213, %214 : vector<2x256xf32>
    %216 = arith.addf %210, %215 : vector<2x256xf32>
    %217 = vector.extract_strided_slice %8 {offsets = [0, 29], sizes = [2, 227], strides = [1, 1]} : vector<2x256xf32> to vector<2x227xf32>
    %218 = vector.extract_strided_slice %8 {offsets = [0, 0], sizes = [2, 29], strides = [1, 1]} : vector<2x256xf32> to vector<2x29xf32>
    %219 = tpu.concatenate %217, %218 in 1 : vector<2x227xf32>, vector<2x29xf32> -> vector<2x256xf32>
    %c70 = arith.constant 70 : index
    %c0_41 = arith.constant 0 : index
    %220 = vector.load %arg2[%c70, %c0_41] : memref<98x256xf32, #tpu.memory_space<vmem>>, vector<2x256xf32>
    %221 = arith.mulf %219, %220 : vector<2x256xf32>
    %222 = arith.addf %216, %221 : vector<2x256xf32>
    %223 = vector.extract_strided_slice %8 {offsets = [0, 30], sizes = [2, 226], strides = [1, 1]} : vector<2x256xf32> to vector<2x226xf32>
    %224 = vector.extract_strided_slice %8 {offsets = [0, 0], sizes = [2, 30], strides = [1, 1]} : vector<2x256xf32> to vector<2x30xf32>
    %225 = tpu.concatenate %223, %224 in 1 : vector<2x226xf32>, vector<2x30xf32> -> vector<2x256xf32>
    %c72 = arith.constant 72 : index
    %c0_42 = arith.constant 0 : index
    %226 = vector.load %arg2[%c72, %c0_42] : memref<98x256xf32, #tpu.memory_space<vmem>>, vector<2x256xf32>
    %227 = arith.mulf %225, %226 : vector<2x256xf32>
    %228 = arith.addf %222, %227 : vector<2x256xf32>
    %229 = vector.extract_strided_slice %8 {offsets = [0, 31], sizes = [2, 225], strides = [1, 1]} : vector<2x256xf32> to vector<2x225xf32>
    %230 = vector.extract_strided_slice %8 {offsets = [0, 0], sizes = [2, 31], strides = [1, 1]} : vector<2x256xf32> to vector<2x31xf32>
    %231 = tpu.concatenate %229, %230 in 1 : vector<2x225xf32>, vector<2x31xf32> -> vector<2x256xf32>
    %c74 = arith.constant 74 : index
    %c0_43 = arith.constant 0 : index
    %232 = vector.load %arg2[%c74, %c0_43] : memref<98x256xf32, #tpu.memory_space<vmem>>, vector<2x256xf32>
    %233 = arith.mulf %231, %232 : vector<2x256xf32>
    %234 = arith.addf %228, %233 : vector<2x256xf32>
    %235 = vector.extract_strided_slice %8 {offsets = [0, 32], sizes = [2, 224], strides = [1, 1]} : vector<2x256xf32> to vector<2x224xf32>
    %236 = vector.extract_strided_slice %8 {offsets = [0, 0], sizes = [2, 32], strides = [1, 1]} : vector<2x256xf32> to vector<2x32xf32>
    %237 = tpu.concatenate %235, %236 in 1 : vector<2x224xf32>, vector<2x32xf32> -> vector<2x256xf32>
    %c76 = arith.constant 76 : index
    %c0_44 = arith.constant 0 : index
    %238 = vector.load %arg2[%c76, %c0_44] : memref<98x256xf32, #tpu.memory_space<vmem>>, vector<2x256xf32>
    %239 = arith.mulf %237, %238 : vector<2x256xf32>
    %240 = arith.addf %234, %239 : vector<2x256xf32>
    %241 = vector.extract_strided_slice %8 {offsets = [0, 33], sizes = [2, 223], strides = [1, 1]} : vector<2x256xf32> to vector<2x223xf32>
    %242 = vector.extract_strided_slice %8 {offsets = [0, 0], sizes = [2, 33], strides = [1, 1]} : vector<2x256xf32> to vector<2x33xf32>
    %243 = tpu.concatenate %241, %242 in 1 : vector<2x223xf32>, vector<2x33xf32> -> vector<2x256xf32>
    %c78 = arith.constant 78 : index
    %c0_45 = arith.constant 0 : index
    %244 = vector.load %arg2[%c78, %c0_45] : memref<98x256xf32, #tpu.memory_space<vmem>>, vector<2x256xf32>
    %245 = arith.mulf %243, %244 : vector<2x256xf32>
    %246 = arith.addf %240, %245 : vector<2x256xf32>
    %247 = vector.extract_strided_slice %8 {offsets = [0, 34], sizes = [2, 222], strides = [1, 1]} : vector<2x256xf32> to vector<2x222xf32>
    %248 = vector.extract_strided_slice %8 {offsets = [0, 0], sizes = [2, 34], strides = [1, 1]} : vector<2x256xf32> to vector<2x34xf32>
    %249 = tpu.concatenate %247, %248 in 1 : vector<2x222xf32>, vector<2x34xf32> -> vector<2x256xf32>
    %c80 = arith.constant 80 : index
    %c0_46 = arith.constant 0 : index
    %250 = vector.load %arg2[%c80, %c0_46] : memref<98x256xf32, #tpu.memory_space<vmem>>, vector<2x256xf32>
    %251 = arith.mulf %249, %250 : vector<2x256xf32>
    %252 = arith.addf %246, %251 : vector<2x256xf32>
    %253 = vector.extract_strided_slice %8 {offsets = [0, 35], sizes = [2, 221], strides = [1, 1]} : vector<2x256xf32> to vector<2x221xf32>
    %254 = vector.extract_strided_slice %8 {offsets = [0, 0], sizes = [2, 35], strides = [1, 1]} : vector<2x256xf32> to vector<2x35xf32>
    %255 = tpu.concatenate %253, %254 in 1 : vector<2x221xf32>, vector<2x35xf32> -> vector<2x256xf32>
    %c82 = arith.constant 82 : index
    %c0_47 = arith.constant 0 : index
    %256 = vector.load %arg2[%c82, %c0_47] : memref<98x256xf32, #tpu.memory_space<vmem>>, vector<2x256xf32>
    %257 = arith.mulf %255, %256 : vector<2x256xf32>
    %258 = arith.addf %252, %257 : vector<2x256xf32>
    %259 = vector.extract_strided_slice %8 {offsets = [0, 45], sizes = [2, 211], strides = [1, 1]} : vector<2x256xf32> to vector<2x211xf32>
    %260 = vector.extract_strided_slice %8 {offsets = [0, 0], sizes = [2, 45], strides = [1, 1]} : vector<2x256xf32> to vector<2x45xf32>
    %261 = tpu.concatenate %259, %260 in 1 : vector<2x211xf32>, vector<2x45xf32> -> vector<2x256xf32>
    %c84 = arith.constant 84 : index
    %c0_48 = arith.constant 0 : index
    %262 = vector.load %arg2[%c84, %c0_48] : memref<98x256xf32, #tpu.memory_space<vmem>>, vector<2x256xf32>
    %263 = arith.mulf %261, %262 : vector<2x256xf32>
    %264 = arith.addf %258, %263 : vector<2x256xf32>
    %265 = vector.extract_strided_slice %8 {offsets = [0, 46], sizes = [2, 210], strides = [1, 1]} : vector<2x256xf32> to vector<2x210xf32>
    %266 = vector.extract_strided_slice %8 {offsets = [0, 0], sizes = [2, 46], strides = [1, 1]} : vector<2x256xf32> to vector<2x46xf32>
    %267 = tpu.concatenate %265, %266 in 1 : vector<2x210xf32>, vector<2x46xf32> -> vector<2x256xf32>
    %c86 = arith.constant 86 : index
    %c0_49 = arith.constant 0 : index
    %268 = vector.load %arg2[%c86, %c0_49] : memref<98x256xf32, #tpu.memory_space<vmem>>, vector<2x256xf32>
    %269 = arith.mulf %267, %268 : vector<2x256xf32>
    %270 = arith.addf %264, %269 : vector<2x256xf32>
    %271 = vector.extract_strided_slice %8 {offsets = [0, 47], sizes = [2, 209], strides = [1, 1]} : vector<2x256xf32> to vector<2x209xf32>
    %272 = vector.extract_strided_slice %8 {offsets = [0, 0], sizes = [2, 47], strides = [1, 1]} : vector<2x256xf32> to vector<2x47xf32>
    %273 = tpu.concatenate %271, %272 in 1 : vector<2x209xf32>, vector<2x47xf32> -> vector<2x256xf32>
    %c88 = arith.constant 88 : index
    %c0_50 = arith.constant 0 : index
    %274 = vector.load %arg2[%c88, %c0_50] : memref<98x256xf32, #tpu.memory_space<vmem>>, vector<2x256xf32>
    %275 = arith.mulf %273, %274 : vector<2x256xf32>
    %276 = arith.addf %270, %275 : vector<2x256xf32>
    %277 = vector.extract_strided_slice %8 {offsets = [0, 48], sizes = [2, 208], strides = [1, 1]} : vector<2x256xf32> to vector<2x208xf32>
    %278 = vector.extract_strided_slice %8 {offsets = [0, 0], sizes = [2, 48], strides = [1, 1]} : vector<2x256xf32> to vector<2x48xf32>
    %279 = tpu.concatenate %277, %278 in 1 : vector<2x208xf32>, vector<2x48xf32> -> vector<2x256xf32>
    %c90 = arith.constant 90 : index
    %c0_51 = arith.constant 0 : index
    %280 = vector.load %arg2[%c90, %c0_51] : memref<98x256xf32, #tpu.memory_space<vmem>>, vector<2x256xf32>
    %281 = arith.mulf %279, %280 : vector<2x256xf32>
    %282 = arith.addf %276, %281 : vector<2x256xf32>
    %283 = vector.extract_strided_slice %8 {offsets = [0, 49], sizes = [2, 207], strides = [1, 1]} : vector<2x256xf32> to vector<2x207xf32>
    %284 = vector.extract_strided_slice %8 {offsets = [0, 0], sizes = [2, 49], strides = [1, 1]} : vector<2x256xf32> to vector<2x49xf32>
    %285 = tpu.concatenate %283, %284 in 1 : vector<2x207xf32>, vector<2x49xf32> -> vector<2x256xf32>
    %c92 = arith.constant 92 : index
    %c0_52 = arith.constant 0 : index
    %286 = vector.load %arg2[%c92, %c0_52] : memref<98x256xf32, #tpu.memory_space<vmem>>, vector<2x256xf32>
    %287 = arith.mulf %285, %286 : vector<2x256xf32>
    %288 = arith.addf %282, %287 : vector<2x256xf32>
    %289 = vector.extract_strided_slice %8 {offsets = [0, 50], sizes = [2, 206], strides = [1, 1]} : vector<2x256xf32> to vector<2x206xf32>
    %290 = vector.extract_strided_slice %8 {offsets = [0, 0], sizes = [2, 50], strides = [1, 1]} : vector<2x256xf32> to vector<2x50xf32>
    %291 = tpu.concatenate %289, %290 in 1 : vector<2x206xf32>, vector<2x50xf32> -> vector<2x256xf32>
    %c94 = arith.constant 94 : index
    %c0_53 = arith.constant 0 : index
    %292 = vector.load %arg2[%c94, %c0_53] : memref<98x256xf32, #tpu.memory_space<vmem>>, vector<2x256xf32>
    %293 = arith.mulf %291, %292 : vector<2x256xf32>
    %294 = arith.addf %288, %293 : vector<2x256xf32>
    %295 = vector.extract_strided_slice %8 {offsets = [0, 51], sizes = [2, 205], strides = [1, 1]} : vector<2x256xf32> to vector<2x205xf32>
    %296 = vector.extract_strided_slice %8 {offsets = [0, 0], sizes = [2, 51], strides = [1, 1]} : vector<2x256xf32> to vector<2x51xf32>
    %297 = tpu.concatenate %295, %296 in 1 : vector<2x205xf32>, vector<2x51xf32> -> vector<2x256xf32>
    %c96 = arith.constant 96 : index
    %c0_54 = arith.constant 0 : index
    %298 = vector.load %arg2[%c96, %c0_54] : memref<98x256xf32, #tpu.memory_space<vmem>>, vector<2x256xf32>
    %299 = arith.mulf %297, %298 : vector<2x256xf32>
    %300 = arith.addf %294, %299 : vector<2x256xf32>
    %cst_55 = arith.constant dense<0.000000e+00> : vector<256xf32>
    %301 = vector.multi_reduction <add>, %300, %cst_55 [0] : vector<2x256xf32> to vector<256xf32>
    %302 = vector.shape_cast %301 : vector<256xf32> to vector<1x256xf32>
    %303 = arith.negf %302 : vector<1x256xf32>
    %304 = math.exp %303 : vector<1x256xf32>
    %cst_56 = arith.constant 1.000000e+00 : f32
    %305 = vector.broadcast %cst_56 : f32 to vector<1x256xf32>
    %306 = arith.addf %305, %304 : vector<1x256xf32>
    %307 = arith.divf %305, %306 : vector<1x256xf32>
    %308 = vector.broadcast %307 : vector<1x256xf32> to vector<4x256xf32>
    %309 = arith.mulf %1, %308 : vector<4x256xf32>
    %c0_57 = arith.constant 0 : index
    %c0_58 = arith.constant 0 : index
    %c0_59 = arith.constant 0 : index
    %310 = vector.load %arg3[%c0_57, %c0_58, %c0_59] : memref<1x4x256xf32, #tpu.memory_space<vmem>>, vector<1x4x256xf32>
    %311 = vector.shape_cast %310 : vector<1x4x256xf32> to vector<4x256xf32>
    %312 = vector.shape_cast %309 : vector<4x256xf32> to vector<1x4x256xf32>
    tpu.vector_store %arg3[%c0_57, %c0_58, %c0_59], %312 {strides = array<i32>} : memref<1x4x256xf32, #tpu.memory_space<vmem>>, vector<1x4x256xf32>,
    return
  }
  func.func @transform_0(%arg0: i32) -> (i32, i32, i32) {
    %c0_i32 = arith.constant 0 : i32
    %c0_i32_0 = arith.constant 0 : i32
    %c0_i32_1 = arith.constant 0 : i32
    return %arg0, %c0_i32, %c0_i32_0 : i32, i32, i32
  }
  func.func @transform_1(%arg0: i32) -> (i32, i32) {
    %c0_i32 = arith.constant 0 : i32
    %c0_i32_0 = arith.constant 0 : i32
    %c0_i32_1 = arith.constant 0 : i32
    return %c0_i32, %c0_i32_0 : i32, i32
  }
  func.func @transform_2(%arg0: i32) -> (i32, i32, i32) {
    %c0_i32 = arith.constant 0 : i32
    %c0_i32_0 = arith.constant 0 : i32
    %c0_i32_1 = arith.constant 0 : i32
    return %arg0, %c0_i32, %c0_i32_0 : i32, i32, i32
  }
}

</mosaic_0001>

<llo_original>
// kernel: tpu_custom_call.1
$region0: #{tpu_custom_call.1}
  #allocation0 [shape = 'u32[]', space=smem, size = 0x4, offset = 0x4, fixed_abs, tag = 'smem constant byte address 0x4 - core index']
  #allocation1 [shape = 'u32[144,128]{1,0:T(1,128)}', space=vmem, size = 0x12000, scoped, tag = 'internal scratch']
  %s0 = inlined_call_operand.hbm [shape: f32[2,4,256], index: 0, kind: input, shape index: {}]
  %s1 = inlined_call_operand.hbm [shape: f32[98,256], index: 1, kind: input, shape index: {}]
  %s2 = inlined_call_operand.hbm [shape: f32[2,4,256], index: 2, kind: output, shape index: {}]
  %s3 = sld [smem:[#allocation0]]
  $region49: #{tpu_custom_call.1} parent=0
    _
  %s5 = ssub.s32 1, %s3
  %s6 = scalar_select 0, %s5, %s3
  $region1: #{tpu_custom_call.1} parent=0
    #allocation2 [shape = 'u8[8192]{0}', space=vmem, size = 0x2000, scoped, tag = 'input window, operand 0']
    #allocation3 [shape = 's32[2]{0}', space=sflag, size = 0x8, scoped, tag = 'scoped memory for tpu_custom_call.1']
    #allocation4 [shape = 's32[2]{0}', space=sflag, size = 0x8, scoped, tag = 'scoped memory for tpu_custom_call.1']
    #allocation5 [shape = 'u8[106496]{0}', space=vmem, size = 0x1a000, scoped, tag = 'input window, operand 1, single buffered']
    #allocation6 [shape = 's32[1]{0}', space=sflag, size = 0x4, scoped, tag = 'scoped memory for tpu_custom_call.1']
    #allocation7 [shape = 'u8[8192]{0}', space=vmem, size = 0x2000, scoped, tag = 'output window, operand 0']
    %7 = vsyncpa [#allocation3], 0
    %s8 = scalar_lea.sflag [#allocation3], 1
    %9 = vsyncpa %s8, 0
    %10 = vsyncpa [#allocation6], 0
    %11 = vsyncpa [#allocation4], 0
    %s12 = scalar_lea.sflag [#allocation4], 1
    %13 = vsyncpa %s12, 0
    loop: start=0, step=1, limit=4
    $region2: #{tpu_custom_call.1} parent=1 // loop_pre_header
      _
    $region3: #{tpu_custom_call.1} parent=1 // loop_header
      %s15 = sphi 0, %s19
      %p16 = scmp.ge.s32.totalorder %s15, 4
      %s25 = sphi 0, %s27
      %s28 = sphi 0, %s25
      %s29 = sphi 0, %s28
      %s45 = sphi 0, %s29
      %s49 = sphi 0, %s49
      %s51 = sphi 0, %s49
      %s52 = sphi 0, %s51
      %s66 = sphi 0, %s52
      %s72 = sphi 0, %s74
      %s75 = sphi 0, %s72
      %s76 = sphi 0, %s75
      %s92 = sphi 0, %s76
    $region4: #{tpu_custom_call.1} parent=1 // loop_header_branch
      %18 = sbr.rel (%p16) target = $region8
    $region5: #{tpu_custom_call.1} parent=1 // loop_body
      %s20 = ssub.s32 %s15, 1
      %s21 = ssub.s32 %s15, 2
      %s22 = sadd.s32 %s15, 1
      %s23 = ssub.s32 %s15, %s22
      %p24 = scmp.eq.s32.totalorder %s23, 0
      %s26 = sadd.s32 %s25, 1
      %s27 = scalar_select %p24, %s25, %s26
      %p30 = pneg %p24
      %p31 = scmp.eq.s32.totalorder %s15, 1
      %p32 = por %p30, %p31
      %p33 = scmp.ne.s32.totalorder %s25, %s28
      %p34 = scmp.eq.s32.totalorder %s15, 0
      %p35 = por %p33, %p34
      %p36 = scmp.ne.s32.totalorder %s25, %s28
      %p37 = scmp.eq.s32.totalorder %s20, 1
      %p38 = por %p36, %p37
      %p39 = scmp.ne.s32.totalorder %s28, %s29
      %p40 = scmp.eq.s32.totalorder %s20, 0
      %p41 = por %p39, %p40
      %p42 = scmp.ne.s32.totalorder %s28, %s29
      %p43 = scmp.eq.s32.totalorder %s21, 1
      %p44 = por %p42, %p43
      %p46 = scmp.ne.s32.totalorder %s29, %s45
      %p47 = scmp.eq.s32.totalorder %s21, 0
      %p48 = por %p46, %p47
      %s50 = sadd.s32 %s49, 1
      %p53 = scmp.eq.s32.totalorder %s15, 1
      %p54 = scmp.ne.s32.totalorder %s49, %s51
      %p55 = scmp.eq.s32.totalorder %s15, 0
      %p56 = por %p54, %p55
      %p57 = scmp.ne.s32.totalorder %s49, %s51
      %p58 = scmp.eq.s32.totalorder %s20, 1
      %p59 = por %p57, %p58
      %p60 = scmp.ne.s32.totalorder %s51, %s52
      %p61 = scmp.eq.s32.totalorder %s20, 0
      %p62 = por %p60, %p61
      %p63 = scmp.ne.s32.totalorder %s51, %s52
      %p64 = scmp.eq.s32.totalorder %s21, 1
      %p65 = por %p63, %p64
      %p67 = scmp.ne.s32.totalorder %s52, %s66
      %p68 = scmp.eq.s32.totalorder %s21, 0
      %p69 = por %p67, %p68
      %s70 = ssub.s32 %s15, %s22
      %p71 = scmp.eq.s32.totalorder %s70, 0
      %s73 = sadd.s32 %s72, 1
      %s74 = scalar_select %p71, %s72, %s73
      %p77 = pneg %p71
      %p78 = scmp.eq.s32.totalorder %s15, 1
      %p79 = por %p77, %p78
      %p80 = scmp.ne.s32.totalorder %s72, %s75
      %p81 = scmp.eq.s32.totalorder %s15, 0
      %p82 = por %p80, %p81
      %p83 = scmp.ne.s32.totalorder %s72, %s75
      %p84 = scmp.eq.s32.totalorder %s20, 1
      %p85 = por %p83, %p84
      %p86 = scmp.ne.s32.totalorder %s75, %s76
      %p87 = scmp.eq.s32.totalorder %s20, 0
      %p88 = por %p86, %p87
      %p89 = scmp.ne.s32.totalorder %s75, %s76
      %p90 = scmp.eq.s32.totalorder %s21, 1
      %p91 = por %p89, %p90
      %p93 = scmp.ne.s32.totalorder %s76, %s92
      %p94 = scmp.eq.s32.totalorder %s21, 0
      %p95 = por %p93, %p94
      %p96 = scmp.le.s32.totalorder 1, %s15
      %p97 = scmp.lt.s32.totalorder %s15, 3
      %p98 = pnand %p96, %p97
      %p99 = pneg %p98
      // Predicated region
      $region9: #{tpu_custom_call.1} parent=5 // pred_check
        _
      $region10: #{tpu_custom_call.1} parent=5 // pred_check_branch
        %101 = sbr.rel (%p98) target = $region12
      $region11: #{tpu_custom_call.1} parent=5 // pred_region
        %s102 = ssub.s32 %s15, 1
        // Predicated region
        $region13: #{tpu_custom_call.1} parent=11 // pred_check
          %p103 = pneg %p62
        $region14: #{tpu_custom_call.1} parent=11 // pred_check_branch
          %105 = sbr.rel (%p103) target = $region16
        $region15: #{tpu_custom_call.1} parent=11 // pred_region
          %s107 = ssub.s32 3328, 3328
          %108 = vsyncadd [#allocation6], %s107
          %s109 = sshll.u32 [#allocation5], 4
          %s110 = int_to_ptr.vmem [resolvable:$true] %s109
          %115 = dma.hbm_to_vmem [thread:$0]  %s1, 3328, %s110, [#allocation6], 256, 256, 16
        $region16: #{tpu_custom_call.1} parent=11 // pred_fallthru
          _
      $region12: #{tpu_custom_call.1} parent=5 // pred_fallthru
        _
      %p116 = scmp.lt.s32.totalorder %s15, 2
      // Predicated region
      $region17: #{tpu_custom_call.1} parent=5 // pred_check
        %p117 = pneg %p116
      $region18: #{tpu_custom_call.1} parent=5 // pred_check_branch
        %119 = sbr.rel (%p117) target = $region20
      $region19: #{tpu_custom_call.1} parent=5 // pred_region
        // Predicated region
        $region21: #{tpu_custom_call.1} parent=19 // pred_check
          %p120 = pneg %p35
        $region22: #{tpu_custom_call.1} parent=19 // pred_check_branch
          %122 = sbr.rel (%p120) target = $region24
        $region23: #{tpu_custom_call.1} parent=19 // pred_region
          %s123 = sand.u32 %s25, 1
          %s124 = scalar_lea.sflag [#allocation3], %s123
          %s125 = sand.u32 %s25, 1
          %s126 = smul.addr %s125, 8
          %s127 = scalar_lea.vmem [#allocation2], %s126
          %s129 = ssub.s32 128, 128
          %130 = vsyncadd %s124, %s129
          %s131 = smul.addr %s15, 2
          %s132 = smul.addr %s131, 64
          %s133 = scalar_lea.hbm %s0, %s132
          %s135 = sshll.u32 %s127, 4
          %s136 = int_to_ptr.vmem [resolvable:$true] %s135
          %138 = dma.hbm_to_vmem [thread:$0]  %s133, 128, %s136, %s124
        $region24: #{tpu_custom_call.1} parent=19 // pred_fallthru
          _
      $region20: #{tpu_custom_call.1} parent=5 // pred_fallthru
        _
      %p139 = scmp.le.s32.totalorder 1, %s15
      %p140 = scmp.lt.s32.totalorder %s15, 3
      %p141 = pnand %p139, %p140
      %p142 = pneg %p141
      // Predicated region
      $region25: #{tpu_custom_call.1} parent=5 // pred_check
        _
      $region26: #{tpu_custom_call.1} parent=5 // pred_check_branch
        %144 = sbr.rel (%p141) target = $region28
      $region27: #{tpu_custom_call.1} parent=5 // pred_region
        %s145 = ssub.s32 %s15, 1
        %s146 = sand.u32 %s28, 1
        %s147 = scalar_lea.sflag [#allocation3], %s146
        %s148 = sand.u32 %s28, 1
        %s149 = smul.addr %s148, 8
        %s150 = scalar_lea.vmem [#allocation2], %s149
        // Predicated region
        $region29: #{tpu_custom_call.1} parent=27 // pred_check
          %p151 = pneg %p41
        $region30: #{tpu_custom_call.1} parent=27 // pred_check_branch
          %153 = sbr.rel (%p151) target = $region32
        $region31: #{tpu_custom_call.1} parent=27 // pred_region
          %154 = dma.done %s147, 128
        $region32: #{tpu_custom_call.1} parent=27 // pred_fallthru
          _
        // Predicated region
        $region33: #{tpu_custom_call.1} parent=27 // pred_check
          %p155 = pneg %p62
        $region34: #{tpu_custom_call.1} parent=27 // pred_check_branch
          %157 = sbr.rel (%p155) target = $region36
        $region35: #{tpu_custom_call.1} parent=27 // pred_region
          %158 = dma.done [#allocation6], 3328
        $region36: #{tpu_custom_call.1} parent=27 // pred_fallthru
          _
        %s159 = sand.u32 %s28, 1
        %s160 = scalar_lea.sflag [#allocation3], %s159
        %s161 = sand.u32 %s28, 1
        %s162 = smul.addr %s161, 8
        %s163 = scalar_lea.vmem [#allocation2], %s162
        %p164 = pneg %p41
        %p165 = pneg %p38
        %p166 = pneg %p62
        %p167 = pneg %p59
        %p168 = pneg %p88
        %p169 = pneg %p85
        %s170 = sand.u32 %s75, 1
        %s171 = scalar_lea.sflag [#allocation4], %s170
        %s172 = sand.u32 %s75, 1
        %s173 = smul.addr %s172, 8
        %s174 = scalar_lea.vmem [#allocation7], %s173
        %v175 = vld [vmem:[%s150] sm:$0xff]
        %v177 = vcombine.high %v175, %v175
        %vm179 = vcmask 1043456
        %v180 = vsel %vm179, %v175, 0.0
        %v181 = vrot.slane %v180, 4
        %v182 = vadd.f32 %v180, %v181
        %v183 = vrot.slane %v182, 2
        %v184 = vadd.f32 %v182, %v183
        %v185 = vrot.slane %v184, 1
        %v186 = vadd.f32 %v184, %v185
        %v187 = vsel %vm179, %v177, 0.0
        %v188 = vrot.slane %v187, 4
        %v189 = vadd.f32 %v187, %v188
        %v190 = vrot.slane %v189, 2
        %v191 = vadd.f32 %v189, %v190
        %v192 = vrot.slane %v191, 1
        %v193 = vadd.f32 %v191, %v192
        %v194 = vrcp.pop 4.0
        %v195 = vmul.f32 %v186, %v194
        %v196 = vmul.f32 %v193, %v194
        %v197 = vsel %vm179, %v175, -inf
        %v198 = vrot.slane %v197, 4
        %v199 = vmax.f32 %v197, %v198
        %v200 = vrot.slane %v199, 2
        %v201 = vmax.f32 %v199, %v200
        %v202 = vrot.slane %v201, 1
        %v203 = vmax.f32 %v201, %v202
        %v204 = vsel %vm179, %v177, -inf
        %v205 = vrot.slane %v204, 4
        %v206 = vmax.f32 %v204, %v205
        %v207 = vrot.slane %v206, 2
        %v208 = vmax.f32 %v206, %v207
        %v209 = vrot.slane %v208, 1
        %v210 = vmax.f32 %v208, %v209
        %vm211 = vcmask 1040384
        %v212 = vsel %vm211, %v195, %v203
        %v213 = vsel %vm211, %v196, %v210
        %215 = vrot.lane.b32.xlu0 %v213, 51
        %v216 = vpop.permute.xlu0 %215
        %219 = vrot.lane.b32.xlu0 %v212, 51
        %v220 = vpop.permute.xlu0 %219
        %vm221 = vcmask 416768
        %v222 = vsel %vm221, %v220, %v216
        %v225 = vsel %vm221, %v216, %v220
        %v226 = vld [vmem:[#allocation5] sm:$0x3]
        %v227 = vld [vmem:[#allocation5 + $0x8] sm:$0x3]
        %v228 = vmul.f32 %v225, %v226
        %v229 = vmul.f32 %v222, %v227
        %v230 = vadd.f32 %v228, 0.0
        %v231 = vadd.f32 %v229, 0.0
        %232 = vrot.lane.b32.xlu0 %v213, 50
        %v233 = vpop.permute.xlu0 %232
        %235 = vrot.lane.b32.xlu0 %v212, 50
        %v236 = vpop.permute.xlu0 %235
        %vm237 = vcmask 408576
        %v238 = vsel %vm237, %v236, %v233
        %v241 = vsel %vm237, %v233, %v236
        %v242 = vld [vmem:[#allocation5] sm:$0xc]
        %v243 = vld [vmem:[#allocation5 + $0x8] sm:$0xc]
        %v246 = vrot.slane %v242, 2
        %v247 = vrot.slane %v243, 2
        %v250 = vmul.f32 %v241, %v246
        %v251 = vmul.f32 %v238, %v247
        %v252 = vadd.f32 %v230, %v250
        %v253 = vadd.f32 %v231, %v251
        %254 = vrot.lane.b32.xlu0 %v213, 49
        %v255 = vpop.permute.xlu0 %254
        %257 = vrot.lane.b32.xlu0 %v212, 49
        %v258 = vpop.permute.xlu0 %257
        %vm259 = vcmask 400384
        %v260 = vsel %vm259, %v258, %v255
        %v263 = vsel %vm259, %v255, %v258
        %v264 = vld [vmem:[#allocation5] sm:$0x30]
        %v265 = vld [vmem:[#allocation5 + $0x8] sm:$0x30]
        %v268 = vrot.slane %v264, 4
        %v269 = vrot.slane %v265, 4
        %v272 = vmul.f32 %v263, %v268
        %v273 = vmul.f32 %v260, %v269
        %v274 = vadd.f32 %v252, %v272
        %v275 = vadd.f32 %v253, %v273
        %276 = vrot.lane.b32.xlu0 %v213, 48
        %v277 = vpop.permute.xlu0 %276
        %279 = vrot.lane.b32.xlu0 %v212, 48
        %v280 = vpop.permute.xlu0 %279
        %vm281 = vcmask 392192
        %v282 = vsel %vm281, %v280, %v277
        %v285 = vsel %vm281, %v277, %v280
        %v286 = vld [vmem:[#allocation5] sm:$0xc0]
        %v287 = vld [vmem:[#allocation5 + $0x8] sm:$0xc0]
        %v290 = vrot.slane %v286, 6
        %v291 = vrot.slane %v287, 6
        %v294 = vmul.f32 %v285, %v290
        %v295 = vmul.f32 %v282, %v291
        %v296 = vadd.f32 %v274, %v294
        %v297 = vadd.f32 %v275, %v295
        %298 = vrot.lane.b32.xlu0 %v213, 47
        %v299 = vpop.permute.xlu0 %298
        %301 = vrot.lane.b32.xlu0 %v212, 47
        %v302 = vpop.permute.xlu0 %301
        %vm303 = vcmask 384000
        %v304 = vsel %vm303, %v302, %v299
        %v307 = vsel %vm303, %v299, %v302
        %v308 = vld [vmem:[#allocation5 + $0x10] sm:$0x3]
        %v309 = vld [vmem:[#allocation5 + $0x18] sm:$0x3]
        %v310 = vmul.f32 %v307, %v308
        %v311 = vmul.f32 %v304, %v309
        %v312 = vadd.f32 %v296, %v310
        %v313 = vadd.f32 %v297, %v311
        %314 = vrot.lane.b32.xlu0 %v213, 46
        %v315 = vpop.permute.xlu0 %314
        %317 = vrot.lane.b32.xlu0 %v212, 46
        %v318 = vpop.permute.xlu0 %317
        %vm319 = vcmask 375808
        %v320 = vsel %vm319, %v318, %v315
        %v323 = vsel %vm319, %v315, %v318
        %v324 = vld [vmem:[#allocation5 + $0x10] sm:$0xc]
        %v325 = vld [vmem:[#allocation5 + $0x18] sm:$0xc]
        %v328 = vrot.slane %v324, 2
        %v329 = vrot.slane %v325, 2
        %v332 = vmul.f32 %v323, %v328
        %v333 = vmul.f32 %v320, %v329
        %v334 = vadd.f32 %v312, %v332
        %v335 = vadd.f32 %v313, %v333
        %336 = vrot.lane.b32.xlu0 %v213, 45
        %v337 = vpop.permute.xlu0 %336
        %339 = vrot.lane.b32.xlu0 %v212, 45
        %v340 = vpop.permute.xlu0 %339
        %vm341 = vcmask 367616
        %v342 = vsel %vm341, %v340, %v337
        %v345 = vsel %vm341, %v337, %v340
        %v346 = vld [vmem:[#allocation5 + $0x10] sm:$0x30]
        %v347 = vld [vmem:[#allocation5 + $0x18] sm:$0x30]
        %v350 = vrot.slane %v346, 4
        %v351 = vrot.slane %v347, 4
        %v354 = vmul.f32 %v345, %v350
        %v355 = vmul.f32 %v342, %v351
        %v356 = vadd.f32 %v334, %v354
        %v357 = vadd.f32 %v335, %v355
        %358 = vrot.lane.b32.xlu0 %v213, 35
        %v359 = vpop.permute.xlu0 %358
        %361 = vrot.lane.b32.xlu0 %v212, 35
        %v362 = vpop.permute.xlu0 %361
        %vm363 = vcmask 285696
        %v364 = vsel %vm363, %v362, %v359
        %v367 = vsel %vm363, %v359, %v362
        %v368 = vld [vmem:[#allocation5 + $0x10] sm:$0xc0]
        %v369 = vld [vmem:[#allocation5 + $0x18] sm:$0xc0]
        %v372 = vrot.slane %v368, 6
        %v373 = vrot.slane %v369, 6
        %v376 = vmul.f32 %v367, %v372
        %v377 = vmul.f32 %v364, %v373
        %v378 = vadd.f32 %v356, %v376
        %v379 = vadd.f32 %v357, %v377
        %380 = vrot.lane.b32.xlu0 %v213, 34
        %v381 = vpop.permute.xlu0 %380
        %383 = vrot.lane.b32.xlu0 %v212, 34
        %v384 = vpop.permute.xlu0 %383
        %vm385 = vcmask 277504
        %v386 = vsel %vm385, %v384, %v381
        %v389 = vsel %vm385, %v381, %v384
        %v390 = vld [vmem:[#allocation5 + $0x20] sm:$0x3]
        %v391 = vld [vmem:[#allocation5 + $0x28] sm:$0x3]
        %v392 = vmul.f32 %v389, %v390
        %v393 = vmul.f32 %v386, %v391
        %v394 = vadd.f32 %v378, %v392
        %v395 = vadd.f32 %v379, %v393
        %396 = vrot.lane.b32.xlu0 %v213, 33
        %v397 = vpop.permute.xlu0 %396
        %399 = vrot.lane.b32.xlu0 %v212, 33
        %v400 = vpop.permute.xlu0 %399
        %vm401 = vcmask 269312
        %v402 = vsel %vm401, %v400, %v397
        %v405 = vsel %vm401, %v397, %v400
        %v406 = vld [vmem:[#allocation5 + $0x20] sm:$0xc]
        %v407 = vld [vmem:[#allocation5 + $0x28] sm:$0xc]
        %v410 = vrot.slane %v406, 2
        %v411 = vrot.slane %v407, 2
        %v414 = vmul.f32 %v405, %v410
        %v415 = vmul.f32 %v402, %v411
        %v416 = vadd.f32 %v394, %v414
        %v417 = vadd.f32 %v395, %v415
        %418 = vrot.lane.b32.xlu0 %v213, 32
        %v419 = vpop.permute.xlu0 %418
        %421 = vrot.lane.b32.xlu0 %v212, 32
        %v422 = vpop.permute.xlu0 %421
        %vm423 = vcmask 261120
        %v424 = vsel %vm423, %v422, %v419
        %v427 = vsel %vm423, %v419, %v422
        %v428 = vld [vmem:[#allocation5 + $0x20] sm:$0x30]
        %v429 = vld [vmem:[#allocation5 + $0x28] sm:$0x30]
        %v432 = vrot.slane %v428, 4
        %v433 = vrot.slane %v429, 4
        %v436 = vmul.f32 %v427, %v432
        %v437 = vmul.f32 %v424, %v433
        %v438 = vadd.f32 %v416, %v436
        %v439 = vadd.f32 %v417, %v437
        %440 = vrot.lane.b32.xlu0 %v213, 31
        %v441 = vpop.permute.xlu0 %440
        %443 = vrot.lane.b32.xlu0 %v212, 31
        %v444 = vpop.permute.xlu0 %443
        %vm445 = vcmask 252928
        %v446 = vsel %vm445, %v444, %v441
        %v449 = vsel %vm445, %v441, %v444
        %v450 = vld [vmem:[#allocation5 + $0x20] sm:$0xc0]
        %v451 = vld [vmem:[#allocation5 + $0x28] sm:$0xc0]
        %v454 = vrot.slane %v450, 6
        %v455 = vrot.slane %v451, 6
        %v458 = vmul.f32 %v449, %v454
        %v459 = vmul.f32 %v446, %v455
        %v460 = vadd.f32 %v438, %v458
        %v461 = vadd.f32 %v439, %v459
        %462 = vrot.lane.b32.xlu0 %v213, 30
        %v463 = vpop.permute.xlu0 %462
        %465 = vrot.lane.b32.xlu0 %v212, 30
        %v466 = vpop.permute.xlu0 %465
        %vm467 = vcmask 244736
        %v468 = vsel %vm467, %v466, %v463
        %v471 = vsel %vm467, %v463, %v466
        %v472 = vld [vmem:[#allocation5 + $0x30] sm:$0x3]
        %v473 = vld [vmem:[#allocation5 + $0x38] sm:$0x3]
        %v474 = vmul.f32 %v471, %v472
        %v475 = vmul.f32 %v468, %v473
        %v476 = vadd.f32 %v460, %v474
        %v477 = vadd.f32 %v461, %v475
        %478 = vrot.lane.b32.xlu0 %v213, 29
        %v479 = vpop.permute.xlu0 %478
        %481 = vrot.lane.b32.xlu0 %v212, 29
        %v482 = vpop.permute.xlu0 %481
        %vm483 = vcmask 236544
        %v484 = vsel %vm483, %v482, %v479
        %v487 = vsel %vm483, %v479, %v482
        %v488 = vld [vmem:[#allocation5 + $0x30] sm:$0xc]
        %v489 = vld [vmem:[#allocation5 + $0x38] sm:$0xc]
        %v492 = vrot.slane %v488, 2
        %v493 = vrot.slane %v489, 2
        %v496 = vmul.f32 %v487, %v492
        %v497 = vmul.f32 %v484, %v493
        %v498 = vadd.f32 %v476, %v496
        %v499 = vadd.f32 %v477, %v497
        %500 = vrot.lane.b32.xlu0 %v213, 19
        %v501 = vpop.permute.xlu0 %500
        %503 = vrot.lane.b32.xlu0 %v212, 19
        %v504 = vpop.permute.xlu0 %503
        %vm505 = vcmask 154624
        %v506 = vsel %vm505, %v504, %v501
        %v509 = vsel %vm505, %v501, %v504
        %v510 = vld [vmem:[#allocation5 + $0x30] sm:$0x30]
        %v511 = vld [vmem:[#allocation5 + $0x38] sm:$0x30]
        %v514 = vrot.slane %v510, 4
        %v515 = vrot.slane %v511, 4
        %v518 = vmul.f32 %v509, %v514
        %v519 = vmul.f32 %v506, %v515
        %v520 = vadd.f32 %v498, %v518
        %v521 = vadd.f32 %v499, %v519
        %522 = vrot.lane.b32.xlu0 %v213, 18
        %v523 = vpop.permute.xlu0 %522
        %525 = vrot.lane.b32.xlu0 %v212, 18
        %v526 = vpop.permute.xlu0 %525
        %vm527 = vcmask 146432
        %v528 = vsel %vm527, %v526, %v523
        %v531 = vsel %vm527, %v523, %v526
        %v532 = vld [vmem:[#allocation5 + $0x30] sm:$0xc0]
        %v533 = vld [vmem:[#allocation5 + $0x38] sm:$0xc0]
        %v536 = vrot.slane %v532, 6
        %v537 = vrot.slane %v533, 6
        %v540 = vmul.f32 %v531, %v536
        %v541 = vmul.f32 %v528, %v537
        %v542 = vadd.f32 %v520, %v540
        %v543 = vadd.f32 %v521, %v541
        %544 = vrot.lane.b32.xlu0 %v213, 17
        %v545 = vpop.permute.xlu0 %544
        %547 = vrot.lane.b32.xlu0 %v212, 17
        %v548 = vpop.permute.xlu0 %547
        %vm549 = vcmask 138240
        %v550 = vsel %vm549, %v548, %v545
        %v553 = vsel %vm549, %v545, %v548
        %v554 = vld [vmem:[#allocation5 + $0x40] sm:$0x3]
        %v555 = vld [vmem:[#allocation5 + $0x48] sm:$0x3]
        %v556 = vmul.f32 %v553, %v554
        %v557 = vmul.f32 %v550, %v555
        %v558 = vadd.f32 %v542, %v556
        %v559 = vadd.f32 %v543, %v557
        %560 = vrot.lane.b32.xlu0 %v213, 16
        %v561 = vpop.permute.xlu0 %560
        %563 = vrot.lane.b32.xlu0 %v212, 16
        %v564 = vpop.permute.xlu0 %563
        %vm565 = vcmask 130048
        %v566 = vsel %vm565, %v564, %v561
        %v569 = vsel %vm565, %v561, %v564
        %v570 = vld [vmem:[#allocation5 + $0x40] sm:$0xc]
        %v571 = vld [vmem:[#allocation5 + $0x48] sm:$0xc]
        %v574 = vrot.slane %v570, 2
        %v575 = vrot.slane %v571, 2
        %v578 = vmul.f32 %v569, %v574
        %v579 = vmul.f32 %v566, %v575
        %v580 = vadd.f32 %v558, %v578
        %v581 = vadd.f32 %v559, %v579
        %582 = vrot.lane.b32.xlu0 %v213, 15
        %v583 = vpop.permute.xlu0 %582
        %585 = vrot.lane.b32.xlu0 %v212, 15
        %v586 = vpop.permute.xlu0 %585
        %vm587 = vcmask 121856
        %v588 = vsel %vm587, %v586, %v583
        %v591 = vsel %vm587, %v583, %v586
        %v592 = vld [vmem:[#allocation5 + $0x40] sm:$0x30]
        %v593 = vld [vmem:[#allocation5 + $0x48] sm:$0x30]
        %v596 = vrot.slane %v592, 4
        %v597 = vrot.slane %v593, 4
        %v600 = vmul.f32 %v591, %v596
        %v601 = vmul.f32 %v588, %v597
        %v602 = vadd.f32 %v580, %v600
        %v603 = vadd.f32 %v581, %v601
        %604 = vrot.lane.b32.xlu0 %v213, 14
        %v605 = vpop.permute.xlu0 %604
        %607 = vrot.lane.b32.xlu0 %v212, 14
        %v608 = vpop.permute.xlu0 %607
        %vm609 = vcmask 113664
        %v610 = vsel %vm609, %v608, %v605
        %v613 = vsel %vm609, %v605, %v608
        %v614 = vld [vmem:[#allocation5 + $0x40] sm:$0xc0]
        %v615 = vld [vmem:[#allocation5 + $0x48] sm:$0xc0]
        %v618 = vrot.slane %v614, 6
        %v619 = vrot.slane %v615, 6
        %v622 = vmul.f32 %v613, %v618
        %v623 = vmul.f32 %v610, %v619
        %v624 = vadd.f32 %v602, %v622
        %v625 = vadd.f32 %v603, %v623
        %626 = vrot.lane.b32.xlu0 %v213, 13
        %v627 = vpop.permute.xlu0 %626
        %629 = vrot.lane.b32.xlu0 %v212, 13
        %v630 = vpop.permute.xlu0 %629
        %vm631 = vcmask 105472
        %v632 = vsel %vm631, %v630, %v627
        %v635 = vsel %vm631, %v627, %v630
        %v636 = vld [vmem:[#allocation5 + $0x50] sm:$0x3]
        %v637 = vld [vmem:[#allocation5 + $0x58] sm:$0x3]
        %v638 = vmul.f32 %v635, %v636
        %v639 = vmul.f32 %v632, %v637
        %v640 = vadd.f32 %v624, %v638
        %v641 = vadd.f32 %v625, %v639
        %642 = vrot.lane.b32.xlu0 %v213, 3
        %v643 = vpop.permute.xlu0 %642
        %645 = vrot.lane.b32.xlu0 %v212, 3
        %v646 = vpop.permute.xlu0 %645
        %vm647 = vcmask 23552
        %v648 = vsel %vm647, %v646, %v643
        %v651 = vsel %vm647, %v643, %v646
        %v652 = vld [vmem:[#allocation5 + $0x50] sm:$0xc]
        %v653 = vld [vmem:[#allocation5 + $0x58] sm:$0xc]
        %v656 = vrot.slane %v652, 2
        %v657 = vrot.slane %v653, 2
        %v660 = vmul.f32 %v651, %v656
        %v661 = vmul.f32 %v648, %v657
        %v662 = vadd.f32 %v640, %v660
        %v663 = vadd.f32 %v641, %v661
        %664 = vrot.lane.b32.xlu0 %v213, 2
        %v665 = vpop.permute.xlu0 %664
        %667 = vrot.lane.b32.xlu0 %v212, 2
        %v668 = vpop.permute.xlu0 %667
        %vm669 = vcmask 15360
        %v670 = vsel %vm669, %v668, %v665
        %v673 = vsel %vm669, %v665, %v668
        %v674 = vld [vmem:[#allocation5 + $0x50] sm:$0x30]
        %v675 = vld [vmem:[#allocation5 + $0x58] sm:$0x30]
        %v678 = vrot.slane %v674, 4
        %v679 = vrot.slane %v675, 4
        %v682 = vmul.f32 %v673, %v678
        %v683 = vmul.f32 %v670, %v679
        %v684 = vadd.f32 %v662, %v682
        %v685 = vadd.f32 %v663, %v683
        %686 = vrot.lane.b32.xlu0 %v213, 1
        %v687 = vpop.permute.xlu0 %686
        %689 = vrot.lane.b32.xlu0 %v212, 1
        %v690 = vpop.permute.xlu0 %689
        %vm691 = vcmask 7168
        %v692 = vsel %vm691, %v690, %v687
        %v695 = vsel %vm691, %v687, %v690
        %v696 = vld [vmem:[#allocation5 + $0x50] sm:$0xc0]
        %v697 = vld [vmem:[#allocation5 + $0x58] sm:$0xc0]
        %v700 = vrot.slane %v696, 6
        %v701 = vrot.slane %v697, 6
        %v704 = vmul.f32 %v695, %v700
        %v705 = vmul.f32 %v692, %v701
        %v706 = vadd.f32 %v684, %v704
        %v707 = vadd.f32 %v685, %v705
        %v708 = vld [vmem:[#allocation5 + $0x60] sm:$0x3]
        %v709 = vld [vmem:[#allocation5 + $0x68] sm:$0x3]
        %v710 = vmul.f32 %v212, %v708
        %v711 = vmul.f32 %v213, %v709
        %v712 = vadd.f32 %v706, %v710
        %v713 = vadd.f32 %v707, %v711
        %714 = vrot.lane.b32.xlu0 %v212, 127
        %v715 = vpop.permute.xlu0 %714
        %716 = vrot.lane.b32.xlu0 %v213, 127
        %v717 = vpop.permute.xlu0 %716
        %vm718 = vcmask 1039360
        %v719 = vsel %vm718, %v715, %v717
        %v723 = vsel %vm718, %v717, %v715
        %v724 = vld [vmem:[#allocation5 + $0x60] sm:$0xc]
        %v725 = vld [vmem:[#allocation5 + $0x68] sm:$0xc]
        %v728 = vrot.slane %v724, 2
        %v729 = vrot.slane %v725, 2
        %v732 = vmul.f32 %v719, %v728
        %v733 = vmul.f32 %v723, %v729
        %v734 = vadd.f32 %v712, %v732
        %v735 = vadd.f32 %v713, %v733
        %736 = vrot.lane.b32.xlu0 %v212, 126
        %v737 = vpop.permute.xlu0 %736
        %738 = vrot.lane.b32.xlu0 %v213, 126
        %v739 = vpop.permute.xlu0 %738
        %vm740 = vcmask 1031168
        %v741 = vsel %vm740, %v737, %v739
        %v745 = vsel %vm740, %v739, %v737
        %v746 = vld [vmem:[#allocation5 + $0x60] sm:$0x30]
        %v747 = vld [vmem:[#allocation5 + $0x68] sm:$0x30]
        %v750 = vrot.slane %v746, 4
        %v751 = vrot.slane %v747, 4
        %v754 = vmul.f32 %v741, %v750
        %v755 = vmul.f32 %v745, %v751
        %v756 = vadd.f32 %v734, %v754
        %v757 = vadd.f32 %v735, %v755
        %758 = vrot.lane.b32.xlu0 %v212, 125
        %v759 = vpop.permute.xlu0 %758
        %760 = vrot.lane.b32.xlu0 %v213, 125
        %v761 = vpop.permute.xlu0 %760
        %vm762 = vcmask 1022976
        %v763 = vsel %vm762, %v759, %v761
        %v767 = vsel %vm762, %v761, %v759
        %v768 = vld [vmem:[#allocation5 + $0x60] sm:$0xc0]
        %v769 = vld [vmem:[#allocation5 + $0x68] sm:$0xc0]
        %v772 = vrot.slane %v768, 6
        %v773 = vrot.slane %v769, 6
        %v776 = vmul.f32 %v763, %v772
        %v777 = vmul.f32 %v767, %v773
        %v778 = vadd.f32 %v756, %v776
        %v779 = vadd.f32 %v757, %v777
        %780 = vrot.lane.b32.xlu0 %v212, 115
        %v781 = vpop.permute.xlu0 %780
        %782 = vrot.lane.b32.xlu0 %v213, 115
        %v783 = vpop.permute.xlu0 %782
        %vm784 = vcmask 941056
        %v785 = vsel %vm784, %v781, %v783
        %v789 = vsel %vm784, %v783, %v781
        %v790 = vld [vmem:[#allocation5 + $0x70] sm:$0x3]
        %v791 = vld [vmem:[#allocation5 + $0x78] sm:$0x3]
        %v792 = vmul.f32 %v785, %v790
        %v793 = vmul.f32 %v789, %v791
        %v794 = vadd.f32 %v778, %v792
        %v795 = vadd.f32 %v779, %v793
        %796 = vrot.lane.b32.xlu0 %v212, 114
        %v797 = vpop.permute.xlu0 %796
        %798 = vrot.lane.b32.xlu0 %v213, 114
        %v799 = vpop.permute.xlu0 %798
        %vm800 = vcmask 932864
        %v801 = vsel %vm800, %v797, %v799
        %v805 = vsel %vm800, %v799, %v797
        %v806 = vld [vmem:[#allocation5 + $0x70] sm:$0xc]
        %v807 = vld [vmem:[#allocation5 + $0x78] sm:$0xc]
        %v810 = vrot.slane %v806, 2
        %v811 = vrot.slane %v807, 2
        %v814 = vmul.f32 %v801, %v810
        %v815 = vmul.f32 %v805, %v811
        %v816 = vadd.f32 %v794, %v814
        %v817 = vadd.f32 %v795, %v815
        %818 = vrot.lane.b32.xlu0 %v212, 113
        %v819 = vpop.permute.xlu0 %818
        %820 = vrot.lane.b32.xlu0 %v213, 113
        %v821 = vpop.permute.xlu0 %820
        %vm822 = vcmask 924672
        %v823 = vsel %vm822, %v819, %v821
        %v827 = vsel %vm822, %v821, %v819
        %v828 = vld [vmem:[#allocation5 + $0x70] sm:$0x30]
        %v829 = vld [vmem:[#allocation5 + $0x78] sm:$0x30]
        %v832 = vrot.slane %v828, 4
        %v833 = vrot.slane %v829, 4
        %v836 = vmul.f32 %v823, %v832
        %v837 = vmul.f32 %v827, %v833
        %v838 = vadd.f32 %v816, %v836
        %v839 = vadd.f32 %v817, %v837
        %840 = vrot.lane.b32.xlu0 %v212, 112
        %v841 = vpop.permute.xlu0 %840
        %842 = vrot.lane.b32.xlu0 %v213, 112
        %v843 = vpop.permute.xlu0 %842
        %vm844 = vcmask 916480
        %v845 = vsel %vm844, %v841, %v843
        %v849 = vsel %vm844, %v843, %v841
        %v850 = vld [vmem:[#allocation5 + $0x70] sm:$0xc0]
        %v851 = vld [vmem:[#allocation5 + $0x78] sm:$0xc0]
        %v854 = vrot.slane %v850, 6
        %v855 = vrot.slane %v851, 6
        %v858 = vmul.f32 %v845, %v854
        %v859 = vmul.f32 %v849, %v855
        %v860 = vadd.f32 %v838, %v858
        %v861 = vadd.f32 %v839, %v859
        %862 = vrot.lane.b32.xlu0 %v212, 111
        %v863 = vpop.permute.xlu0 %862
        %864 = vrot.lane.b32.xlu0 %v213, 111
        %v865 = vpop.permute.xlu0 %864
        %vm866 = vcmask 908288
        %v867 = vsel %vm866, %v863, %v865
        %v871 = vsel %vm866, %v865, %v863
        %v872 = vld [vmem:[#allocation5 + $0x80] sm:$0x3]
        %v873 = vld [vmem:[#allocation5 + $0x88] sm:$0x3]
        %v874 = vmul.f32 %v867, %v872
        %v875 = vmul.f32 %v871, %v873
        %v876 = vadd.f32 %v860, %v874
        %v877 = vadd.f32 %v861, %v875
        %878 = vrot.lane.b32.xlu0 %v212, 110
        %v879 = vpop.permute.xlu0 %878
        %880 = vrot.lane.b32.xlu0 %v213, 110
        %v881 = vpop.permute.xlu0 %880
        %vm882 = vcmask 900096
        %v883 = vsel %vm882, %v879, %v881
        %v887 = vsel %vm882, %v881, %v879
        %v888 = vld [vmem:[#allocation5 + $0x80] sm:$0xc]
        %v889 = vld [vmem:[#allocation5 + $0x88] sm:$0xc]
        %v892 = vrot.slane %v888, 2
        %v893 = vrot.slane %v889, 2
        %v896 = vmul.f32 %v883, %v892
        %v897 = vmul.f32 %v887, %v893
        %v898 = vadd.f32 %v876, %v896
        %v899 = vadd.f32 %v877, %v897
        %900 = vrot.lane.b32.xlu0 %v212, 109
        %v901 = vpop.permute.xlu0 %900
        %902 = vrot.lane.b32.xlu0 %v213, 109
        %v903 = vpop.permute.xlu0 %902
        %vm904 = vcmask 891904
        %v905 = vsel %vm904, %v901, %v903
        %v909 = vsel %vm904, %v903, %v901
        %v910 = vld [vmem:[#allocation5 + $0x80] sm:$0x30]
        %v911 = vld [vmem:[#allocation5 + $0x88] sm:$0x30]
        %v914 = vrot.slane %v910, 4
        %v915 = vrot.slane %v911, 4
        %v918 = vmul.f32 %v905, %v914
        %v919 = vmul.f32 %v909, %v915
        %v920 = vadd.f32 %v898, %v918
        %v921 = vadd.f32 %v899, %v919
        %922 = vrot.lane.b32.xlu0 %v212, 99
        %v923 = vpop.permute.xlu0 %922
        %924 = vrot.lane.b32.xlu0 %v213, 99
        %v925 = vpop.permute.xlu0 %924
        %vm926 = vcmask 809984
        %v927 = vsel %vm926, %v923, %v925
        %v931 = vsel %vm926, %v925, %v923
        %v932 = vld [vmem:[#allocation5 + $0x80] sm:$0xc0]
        %v933 = vld [vmem:[#allocation5 + $0x88] sm:$0xc0]
        %v936 = vrot.slane %v932, 6
        %v937 = vrot.slane %v933, 6
        %v940 = vmul.f32 %v927, %v936
        %v941 = vmul.f32 %v931, %v937
        %v942 = vadd.f32 %v920, %v940
        %v943 = vadd.f32 %v921, %v941
        %944 = vrot.lane.b32.xlu0 %v212, 98
        %v945 = vpop.permute.xlu0 %944
        %946 = vrot.lane.b32.xlu0 %v213, 98
        %v947 = vpop.permute.xlu0 %946
        %vm948 = vcmask 801792
        %v949 = vsel %vm948, %v945, %v947
        %v953 = vsel %vm948, %v947, %v945
        %v954 = vld [vmem:[#allocation5 + $0x90] sm:$0x3]
        %v955 = vld [vmem:[#allocation5 + $0x98] sm:$0x3]
        %v956 = vmul.f32 %v949, %v954
        %v957 = vmul.f32 %v953, %v955
        %v958 = vadd.f32 %v942, %v956
        %v959 = vadd.f32 %v943, %v957
        %960 = vrot.lane.b32.xlu0 %v212, 97
        %v961 = vpop.permute.xlu0 %960
        %962 = vrot.lane.b32.xlu0 %v213, 97
        %v963 = vpop.permute.xlu0 %962
        %vm964 = vcmask 793600
        %v965 = vsel %vm964, %v961, %v963
        %v969 = vsel %vm964, %v963, %v961
        %v970 = vld [vmem:[#allocation5 + $0x90] sm:$0xc]
        %v971 = vld [vmem:[#allocation5 + $0x98] sm:$0xc]
        %v974 = vrot.slane %v970, 2
        %v975 = vrot.slane %v971, 2
        %v978 = vmul.f32 %v965, %v974
        %v979 = vmul.f32 %v969, %v975
        %v980 = vadd.f32 %v958, %v978
        %v981 = vadd.f32 %v959, %v979
        %982 = vrot.lane.b32.xlu0 %v212, 96
        %v983 = vpop.permute.xlu0 %982
        %984 = vrot.lane.b32.xlu0 %v213, 96
        %v985 = vpop.permute.xlu0 %984
        %vm986 = vcmask 785408
        %v987 = vsel %vm986, %v983, %v985
        %v991 = vsel %vm986, %v985, %v983
        %v992 = vld [vmem:[#allocation5 + $0x90] sm:$0x30]
        %v993 = vld [vmem:[#allocation5 + $0x98] sm:$0x30]
        %v996 = vrot.slane %v992, 4
        %v997 = vrot.slane %v993, 4
        %v1000 = vmul.f32 %v987, %v996
        %v1001 = vmul.f32 %v991, %v997
        %v1002 = vadd.f32 %v980, %v1000
        %v1003 = vadd.f32 %v981, %v1001
        %1004 = vrot.lane.b32.xlu0 %v212, 95
        %v1005 = vpop.permute.xlu0 %1004
        %1006 = vrot.lane.b32.xlu0 %v213, 95
        %v1007 = vpop.permute.xlu0 %1006
        %vm1008 = vcmask 777216
        %v1009 = vsel %vm1008, %v1005, %v1007
        %v1013 = vsel %vm1008, %v1007, %v1005
        %v1014 = vld [vmem:[#allocation5 + $0x90] sm:$0xc0]
        %v1015 = vld [vmem:[#allocation5 + $0x98] sm:$0xc0]
        %v1018 = vrot.slane %v1014, 6
        %v1019 = vrot.slane %v1015, 6
        %v1022 = vmul.f32 %v1009, %v1018
        %v1023 = vmul.f32 %v1013, %v1019
        %v1024 = vadd.f32 %v1002, %v1022
        %v1025 = vadd.f32 %v1003, %v1023
        %1026 = vrot.lane.b32.xlu0 %v212, 94
        %v1027 = vpop.permute.xlu0 %1026
        %1028 = vrot.lane.b32.xlu0 %v213, 94
        %v1029 = vpop.permute.xlu0 %1028
        %vm1030 = vcmask 769024
        %v1031 = vsel %vm1030, %v1027, %v1029
        %v1035 = vsel %vm1030, %v1029, %v1027
        %v1036 = vld [vmem:[#allocation5 + $0xa0] sm:$0x3]
        %v1037 = vld [vmem:[#allocation5 + $0xa8] sm:$0x3]
        %v1038 = vmul.f32 %v1031, %v1036
        %v1039 = vmul.f32 %v1035, %v1037
        %v1040 = vadd.f32 %v1024, %v1038
        %v1041 = vadd.f32 %v1025, %v1039
        %1042 = vrot.lane.b32.xlu0 %v212, 93
        %v1043 = vpop.permute.xlu0 %1042
        %1044 = vrot.lane.b32.xlu0 %v213, 93
        %v1045 = vpop.permute.xlu0 %1044
        %vm1046 = vcmask 760832
        %v1047 = vsel %vm1046, %v1043, %v1045
        %v1051 = vsel %vm1046, %v1045, %v1043
        %v1052 = vld [vmem:[#allocation5 + $0xa0] sm:$0xc]
        %v1053 = vld [vmem:[#allocation5 + $0xa8] sm:$0xc]
        %v1056 = vrot.slane %v1052, 2
        %v1057 = vrot.slane %v1053, 2
        %v1060 = vmul.f32 %v1047, %v1056
        %v1061 = vmul.f32 %v1051, %v1057
        %v1062 = vadd.f32 %v1040, %v1060
        %v1063 = vadd.f32 %v1041, %v1061
        %1064 = vrot.lane.b32.xlu0 %v212, 83
        %v1065 = vpop.permute.xlu0 %1064
        %1066 = vrot.lane.b32.xlu0 %v213, 83
        %v1067 = vpop.permute.xlu0 %1066
        %vm1068 = vcmask 678912
        %v1069 = vsel %vm1068, %v1065, %v1067
        %v1073 = vsel %vm1068, %v1067, %v1065
        %v1074 = vld [vmem:[#allocation5 + $0xa0] sm:$0x30]
        %v1075 = vld [vmem:[#allocation5 + $0xa8] sm:$0x30]
        %v1078 = vrot.slane %v1074, 4
        %v1079 = vrot.slane %v1075, 4
        %v1082 = vmul.f32 %v1069, %v1078
        %v1083 = vmul.f32 %v1073, %v1079
        %v1084 = vadd.f32 %v1062, %v1082
        %v1085 = vadd.f32 %v1063, %v1083
        %1086 = vrot.lane.b32.xlu0 %v212, 82
        %v1087 = vpop.permute.xlu0 %1086
        %1088 = vrot.lane.b32.xlu0 %v213, 82
        %v1089 = vpop.permute.xlu0 %1088
        %vm1090 = vcmask 670720
        %v1091 = vsel %vm1090, %v1087, %v1089
        %v1095 = vsel %vm1090, %v1089, %v1087
        %v1096 = vld [vmem:[#allocation5 + $0xa0] sm:$0xc0]
        %v1097 = vld [vmem:[#allocation5 + $0xa8] sm:$0xc0]
        %v1100 = vrot.slane %v1096, 6
        %v1101 = vrot.slane %v1097, 6
        %v1104 = vmul.f32 %v1091, %v1100
        %v1105 = vmul.f32 %v1095, %v1101
        %v1106 = vadd.f32 %v1084, %v1104
        %v1107 = vadd.f32 %v1085, %v1105
        %1108 = vrot.lane.b32.xlu0 %v212, 81
        %v1109 = vpop.permute.xlu0 %1108
        %1110 = vrot.lane.b32.xlu0 %v213, 81
        %v1111 = vpop.permute.xlu0 %1110
        %vm1112 = vcmask 662528
        %v1113 = vsel %vm1112, %v1109, %v1111
        %v1117 = vsel %vm1112, %v1111, %v1109
        %v1118 = vld [vmem:[#allocation5 + $0xb0] sm:$0x3]
        %v1119 = vld [vmem:[#allocation5 + $0xb8] sm:$0x3]
        %v1120 = vmul.f32 %v1113, %v1118
        %v1121 = vmul.f32 %v1117, %v1119
        %v1122 = vadd.f32 %v1106, %v1120
        %v1123 = vadd.f32 %v1107, %v1121
        %1124 = vrot.lane.b32.xlu0 %v212, 80
        %v1125 = vpop.permute.xlu0 %1124
        %1126 = vrot.lane.b32.xlu0 %v213, 80
        %v1127 = vpop.permute.xlu0 %1126
        %vm1128 = vcmask 654336
        %v1129 = vsel %vm1128, %v1125, %v1127
        %v1133 = vsel %vm1128, %v1127, %v1125
        %v1134 = vld [vmem:[#allocation5 + $0xb0] sm:$0xc]
        %v1135 = vld [vmem:[#allocation5 + $0xb8] sm:$0xc]
        %v1138 = vrot.slane %v1134, 2
        %v1139 = vrot.slane %v1135, 2
        %v1142 = vmul.f32 %v1129, %v1138
        %v1143 = vmul.f32 %v1133, %v1139
        %v1144 = vadd.f32 %v1122, %v1142
        %v1145 = vadd.f32 %v1123, %v1143
        %1146 = vrot.lane.b32.xlu0 %v212, 79
        %v1147 = vpop.permute.xlu0 %1146
        %1148 = vrot.lane.b32.xlu0 %v213, 79
        %v1149 = vpop.permute.xlu0 %1148
        %vm1150 = vcmask 646144
        %v1151 = vsel %vm1150, %v1147, %v1149
        %v1155 = vsel %vm1150, %v1149, %v1147
        %v1156 = vld [vmem:[#allocation5 + $0xb0] sm:$0x30]
        %v1157 = vld [vmem:[#allocation5 + $0xb8] sm:$0x30]
        %v1160 = vrot.slane %v1156, 4
        %v1161 = vrot.slane %v1157, 4
        %v1164 = vmul.f32 %v1151, %v1160
        %v1165 = vmul.f32 %v1155, %v1161
        %v1166 = vadd.f32 %v1144, %v1164
        %v1167 = vadd.f32 %v1145, %v1165
        %1168 = vrot.lane.b32.xlu0 %v212, 78
        %v1169 = vpop.permute.xlu0 %1168
        %1170 = vrot.lane.b32.xlu0 %v213, 78
        %v1171 = vpop.permute.xlu0 %1170
        %vm1172 = vcmask 637952
        %v1173 = vsel %vm1172, %v1169, %v1171
        %v1177 = vsel %vm1172, %v1171, %v1169
        %v1178 = vld [vmem:[#allocation5 + $0xb0] sm:$0xc0]
        %v1179 = vld [vmem:[#allocation5 + $0xb8] sm:$0xc0]
        %v1182 = vrot.slane %v1178, 6
        %v1183 = vrot.slane %v1179, 6
        %v1186 = vmul.f32 %v1173, %v1182
        %v1187 = vmul.f32 %v1177, %v1183
        %v1188 = vadd.f32 %v1166, %v1186
        %v1189 = vadd.f32 %v1167, %v1187
        %1190 = vrot.lane.b32.xlu0 %v212, 77
        %v1191 = vpop.permute.xlu0 %1190
        %1192 = vrot.lane.b32.xlu0 %v213, 77
        %v1193 = vpop.permute.xlu0 %1192
        %vm1194 = vcmask 629760
        %v1195 = vsel %vm1194, %v1191, %v1193
        %v1199 = vsel %vm1194, %v1193, %v1191
        %v1200 = vld [vmem:[#allocation5 + $0xc0] sm:$0x3]
        %v1201 = vld [vmem:[#allocation5 + $0xc8] sm:$0x3]
        %v1202 = vmul.f32 %v1195, %v1200
        %v1203 = vmul.f32 %v1199, %v1201
        %v1204 = vadd.f32 %v1188, %v1202
        %v1205 = vadd.f32 %v1189, %v1203
        %vm1206 = vcmask 1041408
        %v1207 = vsel %vm1206, %v1204, 0.0
        %v1208 = vrot.slane %v1207, 4
        %v1209 = vadd.f32 %v1207, %v1208
        %v1210 = vrot.slane %v1209, 2
        %v1211 = vadd.f32 %v1209, %v1210
        %v1212 = vrot.slane %v1211, 1
        %v1213 = vadd.f32 %v1211, %v1212
        %v1214 = vsel %vm1206, %v1205, 0.0
        %v1215 = vrot.slane %v1214, 4
        %v1216 = vadd.f32 %v1214, %v1215
        %v1217 = vrot.slane %v1216, 2
        %v1218 = vadd.f32 %v1216, %v1217
        %v1219 = vrot.slane %v1218, 1
        %v1220 = vadd.f32 %v1218, %v1219
        %v1221 = vxor.u32 %v1213, 2147483648
        %v1222 = vxor.u32 %v1220, 2147483648
        %v1223 = vmul.f32 %v1221, 1.442695
        %v1224 = vpow.pop %v1223
        %v1225 = vmul.f32 %v1222, 1.442695
        %v1226 = vpow.pop %v1225
        %v1227 = vadd.f32 %v1224, 1.0
        %v1228 = vadd.f32 %v1226, 1.0
        %v1229 = vrcp.pop %v1227
        %v1230 = vmul.f32 1.0, %v1229
        %v1231 = vrcp.pop %v1228
        %v1232 = vmul.f32 1.0, %v1231
        %v1235 = vcombine.low %v1230, %v1232
        %v1237 = vmul.f32 %v175, %v1235
        %1238 = vst [vmem:[%s174] sm:$0xff] %v1237
        %s1239 = sand.u32 %s75, 1
        %s1240 = scalar_lea.sflag [#allocation4], %s1239
        %s1241 = sand.u32 %s75, 1
        %s1242 = smul.addr %s1241, 8
        %s1243 = scalar_lea.vmem [#allocation7], %s1242
        // Predicated region
        $region37: #{tpu_custom_call.1} parent=27 // pred_check
          %p1244 = pneg %p85
        $region38: #{tpu_custom_call.1} parent=27 // pred_check_branch
          %1246 = sbr.rel (%p1244) target = $region40
        $region39: #{tpu_custom_call.1} parent=27 // pred_region
          %s1248 = ssub.s32 128, 128
          %1249 = vsyncadd %s1240, %s1248
          %s1250 = smul.addr %s20, 2
          %s1251 = smul.addr %s1250, 64
          %s1252 = scalar_lea.hbm %s2, %s1251
          %s1254 = sshll.u32 %s1243, 4
          %s1255 = int_to_ptr.vmem [resolvable:$true] %s1254
          %1257 = dma.vmem_to_hbm [thread:$0]  %s1255, 128, %s1252, %s1240
        $region40: #{tpu_custom_call.1} parent=27 // pred_fallthru
          _
      $region28: #{tpu_custom_call.1} parent=5 // pred_fallthru
        _
      %p1258 = scmp.le.s32.totalorder 2, %s15
      // Predicated region
      $region41: #{tpu_custom_call.1} parent=5 // pred_check
        %p1259 = pneg %p1258
      $region42: #{tpu_custom_call.1} parent=5 // pred_check_branch
        %1261 = sbr.rel (%p1259) target = $region44
      $region43: #{tpu_custom_call.1} parent=5 // pred_region
        %s1262 = ssub.s32 %s15, 2
        // Predicated region
        $region45: #{tpu_custom_call.1} parent=43 // pred_check
          %p1263 = pneg %p91
        $region46: #{tpu_custom_call.1} parent=43 // pred_check_branch
          %1265 = sbr.rel (%p1263) target = $region48
        $region47: #{tpu_custom_call.1} parent=43 // pred_region
          %s1266 = sand.u32 %s76, 1
          %s1267 = scalar_lea.sflag [#allocation4], %s1266
          %s1268 = sand.u32 %s76, 1
          %s1269 = smul.addr %s1268, 8
          %s1270 = scalar_lea.vmem [#allocation7], %s1269
          %1271 = dma.done %s1267, 128
        $region48: #{tpu_custom_call.1} parent=43 // pred_fallthru
          _
      $region44: #{tpu_custom_call.1} parent=5 // pred_fallthru
        _
    $region6: #{tpu_custom_call.1} parent=1 // loop_footer
      %s19 = sadd.s32 1, %s15
    $region7: #{tpu_custom_call.1} parent=1 // loop_footer_branch
      %14 = sbr.rel target = $region3
    $region8: #{tpu_custom_call.1} parent=1 // loop_exit
      _
    %1272 = vsyncpa [#allocation3], 1
    %s1273 = scalar_lea.sflag [#allocation3], 1
    %1274 = vsyncpa %s1273, 1
    %1275 = vsyncpa [#allocation6], 1
    %1276 = vsyncpa [#allocation4], 1
    %s1277 = scalar_lea.sflag [#allocation4], 1
    %1278 = vsyncpa %s1277, 1

</llo_original>
